<compile_context>
chip_gen: v7x
topology: tpu7x:2x2x1
jax: 0.10.0
libtpu: 0.0.40
codegen_flags: <defaults>
</compile_context>

<pallas_src>
import jax
import jax.numpy as jnp
from jax import lax
from jax.experimental import pallas as pl
from jax.experimental.pallas import tpu as pltpu

INPUT_SIZE = 16        # flattened feature size per sample (lookback=8 * features=2)
HIDDEN = 32            # hidden_size
NUM_HEADS = 4          # num_heads (head_dim = 8; cancels out since seq_len == 1)
NUM_LAYERS = 2         # num_layers
FFN = 2048             # nn.TransformerEncoderLayer default dim_feedforward
LN_EPS = 1e-5
BATCH = 4
OUT_PAD = 128          # lane-dense output slab; sliced to width 1 in the wrapper
MAX_TILE_B = 256       # batch rows per grid step (shards across TCs on v7x)


def _layer_norm(x, gamma, beta):
    mean = jnp.mean(x, axis=-1, keepdims=True)
    var = jnp.mean((x - mean) ** 2, axis=-1, keepdims=True)   # biased var (PyTorch)
    return (x - mean) * lax.rsqrt(var + LN_EPS) * gamma + beta


def transformer_kernel(x_ref, emb_w_ref, attn_w_ref, w1_ref, b1_ref, w2_ref,
                       lslab_ref, mslab_ref, out_ref):
    f32 = jnp.float32
    bf16 = jnp.bfloat16
    mslab = mslab_ref[...]            # (3, HIDDEN): emb_b / fc_w / [fc_b, 0...]
    lslab = lslab_ref[...]            # (L, 6, HIDDEN): attn_b,b2,ln1_g,ln1_b,ln2_g,ln2_b

    # embedding: Linear(input_size -> hidden)
    h = jnp.dot(x_ref[...], emb_w_ref[...], preferred_element_type=f32) \
        + mslab[0, :][None, :]

    for l in range(NUM_LAYERS):       # static unroll over encoder layers
        attn_b = lslab[l, 0, :][None, :]
        b2     = lslab[l, 1, :][None, :]
        ln1_g  = lslab[l, 2, :][None, :]
        ln1_b  = lslab[l, 3, :][None, :]
        ln2_g  = lslab[l, 4, :][None, :]
        ln2_b  = lslab[l, 5, :][None, :]

        # --- Self-attention block (post-norm) ---
        # seq_len == 1: MHA == out_proj(value_proj(h)); folded to ONE matmul
        # (attn_w = Wv.T @ Wo.T, attn_b = bv @ Wo.T + bo, precomputed at prep).
        attn = jnp.dot(h, attn_w_ref[l], preferred_element_type=f32) + attn_b
        h = _layer_norm(h + attn, ln1_g, ln1_b)

        # --- Feed-forward: linear1 -> ReLU -> linear2 (bf16 weights, f32 acc) ---
        ff = jnp.dot(h.astype(bf16), w1_ref[l], preferred_element_type=f32) \
             + b1_ref[l][None, :]
        ff = jnp.maximum(ff, 0.0)
        # w2 kept in native (HIDDEN, FFN) layout (lane-dense); contract over FFN.
        ff = lax.dot_general(ff.astype(bf16), w2_ref[l],
                             dimension_numbers=(((1,), (1,)), ((), ())),
                             preferred_element_type=f32) + b2
        h = _layer_norm(h + ff, ln2_g, ln2_b)

    # x[:, -1, :] selects the single token; fc: Linear(hidden -> 1) as a
    # row-wise dot (avoids a 1-lane-wide MXU tile), then lane-dense store.
    y = jnp.sum(h * mslab[1, :][None, :], axis=-1, keepdims=True) + mslab[2, 0]
    out_ref[...] = jnp.broadcast_to(y, out_ref.shape)


def init_params(key):
    """Deterministic synthetic parameters, PyTorch (out, in) weight convention."""
    ks = jax.random.split(key, 12)
    nrm = lambda k, shape, s=0.05: jax.random.normal(k, shape, jnp.float32) * s
    return dict(
        emb_w=nrm(ks[0], (HIDDEN, INPUT_SIZE)),
        emb_b=nrm(ks[1], (HIDDEN,)),
        # value slice of in_proj_weight / in_proj_bias of MultiheadAttention
        wv=nrm(ks[2], (NUM_LAYERS, HIDDEN, HIDDEN)),
        bv=nrm(ks[3], (NUM_LAYERS, HIDDEN)),
        wo=nrm(ks[4], (NUM_LAYERS, HIDDEN, HIDDEN)),
        bo=nrm(ks[5], (NUM_LAYERS, HIDDEN)),
        w1=nrm(ks[6], (NUM_LAYERS, FFN, HIDDEN)),
        b1=nrm(ks[7], (NUM_LAYERS, FFN)),
        w2=nrm(ks[8], (NUM_LAYERS, HIDDEN, FFN)),
        b2=nrm(ks[9], (NUM_LAYERS, HIDDEN)),
        ln1_g=jnp.ones((NUM_LAYERS, HIDDEN), jnp.float32),
        ln1_b=jnp.zeros((NUM_LAYERS, HIDDEN), jnp.float32),
        ln2_g=jnp.ones((NUM_LAYERS, HIDDEN), jnp.float32),
        ln2_b=jnp.zeros((NUM_LAYERS, HIDDEN), jnp.float32),
        fc_w=nrm(ks[10], (1, HIDDEN)),
        fc_b=nrm(ks[11], (1,)),
    )


def prepare_params(p):
    """One-time preprocessing: transposes, attention fold, bf16 cast, packing."""
    wv, wo, bv, bo = p['wv'], p['wo'], p['bv'], p['bo']
    # seq_len==1 fold: attn(h) = h @ (Wv.T @ Wo.T) + (bv @ Wo.T + bo)
    attn_w = jnp.transpose(jnp.einsum('lab,lbc->lac', wo, wv), (0, 2, 1))  # (L,H,H)
    attn_b = jnp.einsum('lb,lab->la', bv, wo) + bo                         # (L,H)

    lslab = jnp.stack([attn_b, p['b2'], p['ln1_g'], p['ln1_b'],
                       p['ln2_g'], p['ln2_b']], axis=1)                    # (L,6,H)
    fc_b_row = jnp.zeros((HIDDEN,), jnp.float32).at[0].set(p['fc_b'][0])
    mslab = jnp.stack([p['emb_b'], p['fc_w'][0], fc_b_row], axis=0)        # (3,H)

    return dict(
        emb_w=p['emb_w'].T,                                          # (IN, H) f32
        attn_w=attn_w,                                               # (L, H, H) f32
        w1=jnp.transpose(p['w1'], (0, 2, 1)).astype(jnp.bfloat16),   # (L, H, FFN)
        b1=p['b1'],                                                  # (L, FFN) f32
        w2=p['w2'].astype(jnp.bfloat16),                             # (L, H, FFN) native
        lslab=lslab,
        mslab=mslab,
    )


def transformer_forward(x, prep):
    B = x.shape[0]
    xf = x.astype(jnp.float32).reshape(B, -1)        # x.float(); x.view(B, -1)

    # Pad batch to a sublane multiple and tile it over a parallel grid axis.
    b_pad8 = max(8, ((B + 7) // 8) * 8)
    tile_b = min(MAX_TILE_B, b_pad8)
    b_pad = ((b_pad8 + tile_b - 1) // tile_b) * tile_b
    if b_pad != B:
        xf = jnp.pad(xf, ((0, b_pad - B), (0, 0)))
    n_tiles = b_pad // tile_b

    def rep(shape):   # weight stays resident: same block index every grid step
        return pl.BlockSpec(shape, lambda i, _n=len(shape): (0,) * _n)

    in_specs = [
        pl.BlockSpec((tile_b, INPUT_SIZE), lambda i: (i, 0)),   # x
        rep((INPUT_SIZE, HIDDEN)),                              # emb_w
        rep((NUM_LAYERS, HIDDEN, HIDDEN)),                      # attn_w (folded)
        rep((NUM_LAYERS, HIDDEN, FFN)),                         # w1 (bf16)
        rep((NUM_LAYERS, FFN)),                                 # b1
        rep((NUM_LAYERS, HIDDEN, FFN)),                         # w2 (bf16, native)
        rep((NUM_LAYERS, 6, HIDDEN)),                           # per-layer slab
        rep((3, HIDDEN)),                                       # misc slab
    ]
    out = pl.pallas_call(
        transformer_kernel,
        out_shape=jax.ShapeDtypeStruct((b_pad, OUT_PAD), jnp.float32),
        grid=(n_tiles,),
        in_specs=in_specs,
        out_specs=pl.BlockSpec((tile_b, OUT_PAD), lambda i: (i, 0)),
        compiler_params=pltpu.CompilerParams(
            dimension_semantics=("parallel",)),
    )(xf, prep['emb_w'], prep['attn_w'], prep['w1'], prep['b1'],
      prep['w2'], prep['lslab'], prep['mslab'])
    return out[:B, :1]


def reference_forward(x, p):
    """Pure-JAX reference reproducing the PyTorch forward exactly (f32, eval)."""
    B = x.shape[0]
    h = x.astype(jnp.float32).reshape(B, -1) @ p['emb_w'].T + p['emb_b']
    for l in range(NUM_LAYERS):
        v = h @ p['wv'][l].T + p['bv'][l]
        attn = v @ p['wo'][l].T + p['bo'][l]
        h = _layer_norm(h + attn, p['ln1_g'][l], p['ln1_b'][l])
        ff = jnp.maximum(h @ p['w1'][l].T + p['b1'][l], 0.0) @ p['w2'][l].T + p['b2'][l]
        h = _layer_norm(h + ff, p['ln2_g'][l], p['ln2_b'][l])
    return h @ p['fc_w'].T + p['fc_b']


if __name__ == "__main__":
    key = jax.random.PRNGKey(0)
    k_x, k_p = jax.random.split(key)
    # x: (batch, lookback, features) -> module flattens to (batch, 16)
    x = jax.random.normal(k_x, (BATCH, 8, 2), jnp.float32)
    params = init_params(k_p)
    prep = prepare_params(params)          # one-time: transposes / fold / bf16 / pack

    out = transformer_forward(x, prep)
    out = jax.block_until_ready(out)

    ref = reference_forward(x, params)
    assert out.shape == (BATCH, 1)
    # bf16 FFN weights introduce ~0.1-0.3% relative error vs the exact f32 ref;
    # output scale is ~0.3, so 1e-2 tolerance leaves ample margin.
    assert jnp.allclose(out, ref, atol=1e-2, rtol=1e-2), "mismatch vs JAX reference"
    print("KERNEL_OK")
</pallas_src>

<mosaic_0001>
module attributes {stable_mosaic.version = 11 : i64} {
  func.func @transformer_kernel(%arg0: i32, %arg1: memref<8x16xf32, #tpu.memory_space<vmem>>, %arg2: memref<16x32xf32, #tpu.memory_space<vmem>>, %arg3: memref<2x32x32xf32, #tpu.memory_space<vmem>>, %arg4: memref<2x32x2048xbf16, #tpu.memory_space<vmem>>, %arg5: memref<2x2048xf32, #tpu.memory_space<vmem>>, %arg6: memref<2x32x2048xbf16, #tpu.memory_space<vmem>>, %arg7: memref<2x6x32xf32, #tpu.memory_space<vmem>>, %arg8: memref<3x32xf32, #tpu.memory_space<vmem>>, %arg9: memref<8x128xf32, #tpu.memory_space<vmem>>) attributes {dimension_semantics = [#tpu.dimension_semantics<parallel>], iteration_bounds = array<i64: 1>, scalar_prefetch = 0 : i64, scratch_operands = 0 : i64, tpu.core_type = #tpu.core_type<tc>, window_params = [{transform_indices = @transform_0, window_bounds = array<i64: 8, 16>}, {pipeline_mode = #tpu.pipeline_mode<synchronous>, transform_indices = @transform_1, window_bounds = array<i64: 16, 32>}, {pipeline_mode = #tpu.pipeline_mode<synchronous>, transform_indices = @transform_2, window_bounds = array<i64: 2, 32, 32>}, {pipeline_mode = #tpu.pipeline_mode<synchronous>, transform_indices = @transform_3, window_bounds = array<i64: 2, 32, 2048>}, {pipeline_mode = #tpu.pipeline_mode<synchronous>, transform_indices = @transform_4, window_bounds = array<i64: 2, 2048>}, {pipeline_mode = #tpu.pipeline_mode<synchronous>, transform_indices = @transform_5, window_bounds = array<i64: 2, 32, 2048>}, {pipeline_mode = #tpu.pipeline_mode<synchronous>, transform_indices = @transform_6, window_bounds = array<i64: 2, 6, 32>}, {pipeline_mode = #tpu.pipeline_mode<synchronous>, transform_indices = @transform_7, window_bounds = array<i64: 3, 32>}, {transform_indices = @transform_8, window_bounds = array<i64: 8, 128>}]} {
    %c0 = arith.constant 0 : index
    %c0_0 = arith.constant 0 : index
    %0 = vector.load %arg8[%c0, %c0_0] : memref<3x32xf32, #tpu.memory_space<vmem>>, vector<3x32xf32>
    %c0_1 = arith.constant 0 : index
    %c0_2 = arith.constant 0 : index
    %c0_3 = arith.constant 0 : index
    %1 = vector.load %arg7[%c0_1, %c0_2, %c0_3] : memref<2x6x32xf32, #tpu.memory_space<vmem>>, vector<2x6x32xf32>
    %c0_4 = arith.constant 0 : index
    %c0_5 = arith.constant 0 : index
    %2 = vector.load %arg1[%c0_4, %c0_5] : memref<8x16xf32, #tpu.memory_space<vmem>>, vector<8x16xf32>
    %c0_6 = arith.constant 0 : index
    %c0_7 = arith.constant 0 : index
    %3 = vector.load %arg2[%c0_6, %c0_7] : memref<16x32xf32, #tpu.memory_space<vmem>>, vector<16x32xf32>
    %cst = arith.constant dense<0.000000e+00> : vector<8x32xf32>
    %4 = tpu.matmul %2, %3, %cst {dimension_numbers = #tpu.dot_dimension_numbers<[1], [0], [0], [1], [0, 0, 1, 1], [], []>} : vector<8x16xf32>, vector<16x32xf32>, vector<8x32xf32> -> vector<8x32xf32>
    %5 = vector.extract_strided_slice %0 {offsets = [0, 0], sizes = [1, 32], strides = [1, 1]} : vector<3x32xf32> to vector<1x32xf32>
    %6 = vector.shape_cast %5 : vector<1x32xf32> to vector<32xf32>
    %7 = vector.shape_cast %6 : vector<32xf32> to vector<1x32xf32>
    %8 = vector.broadcast %7 : vector<1x32xf32> to vector<8x32xf32>
    %9 = arith.addf %4, %8 : vector<8x32xf32>
    %10 = vector.extract_strided_slice %1 {offsets = [0, 0, 0], sizes = [1, 1, 32], strides = [1, 1, 1]} : vector<2x6x32xf32> to vector<1x1x32xf32>
    %11 = vector.shape_cast %10 : vector<1x1x32xf32> to vector<32xf32>
    %12 = vector.shape_cast %11 : vector<32xf32> to vector<1x32xf32>
    %13 = vector.extract_strided_slice %1 {offsets = [0, 1, 0], sizes = [1, 1, 32], strides = [1, 1, 1]} : vector<2x6x32xf32> to vector<1x1x32xf32>
    %14 = vector.shape_cast %13 : vector<1x1x32xf32> to vector<32xf32>
    %15 = vector.shape_cast %14 : vector<32xf32> to vector<1x32xf32>
    %16 = vector.extract_strided_slice %1 {offsets = [0, 2, 0], sizes = [1, 1, 32], strides = [1, 1, 1]} : vector<2x6x32xf32> to vector<1x1x32xf32>
    %17 = vector.shape_cast %16 : vector<1x1x32xf32> to vector<32xf32>
    %18 = vector.shape_cast %17 : vector<32xf32> to vector<1x32xf32>
    %19 = vector.extract_strided_slice %1 {offsets = [0, 3, 0], sizes = [1, 1, 32], strides = [1, 1, 1]} : vector<2x6x32xf32> to vector<1x1x32xf32>
    %20 = vector.shape_cast %19 : vector<1x1x32xf32> to vector<32xf32>
    %21 = vector.shape_cast %20 : vector<32xf32> to vector<1x32xf32>
    %22 = vector.extract_strided_slice %1 {offsets = [0, 4, 0], sizes = [1, 1, 32], strides = [1, 1, 1]} : vector<2x6x32xf32> to vector<1x1x32xf32>
    %23 = vector.shape_cast %22 : vector<1x1x32xf32> to vector<32xf32>
    %24 = vector.shape_cast %23 : vector<32xf32> to vector<1x32xf32>
    %25 = vector.extract_strided_slice %1 {offsets = [0, 5, 0], sizes = [1, 1, 32], strides = [1, 1, 1]} : vector<2x6x32xf32> to vector<1x1x32xf32>
    %26 = vector.shape_cast %25 : vector<1x1x32xf32> to vector<32xf32>
    %27 = vector.shape_cast %26 : vector<32xf32> to vector<1x32xf32>
    %c0_8 = arith.constant 0 : index
    %c0_9 = arith.constant 0 : index
    %c0_10 = arith.constant 0 : index
    %28 = vector.load %arg3[%c0_8, %c0_9, %c0_10] : memref<2x32x32xf32, #tpu.memory_space<vmem>>, vector<1x32x32xf32>
    %29 = vector.shape_cast %28 : vector<1x32x32xf32> to vector<32x32xf32>
    %cst_11 = arith.constant dense<0.000000e+00> : vector<8x32xf32>
    %30 = tpu.matmul %9, %29, %cst_11 {dimension_numbers = #tpu.dot_dimension_numbers<[1], [0], [0], [1], [0, 0, 1, 1], [], []>} : vector<8x32xf32>, vector<32x32xf32>, vector<8x32xf32> -> vector<8x32xf32>
    %31 = vector.broadcast %12 : vector<1x32xf32> to vector<8x32xf32>
    %32 = arith.addf %30, %31 : vector<8x32xf32>
    %33 = arith.addf %9, %32 : vector<8x32xf32>
    %cst_12 = arith.constant dense<0.000000e+00> : vector<8xf32>
    %34 = vector.multi_reduction <add>, %33, %cst_12 [1] : vector<8x32xf32> to vector<8xf32>
    %35 = vector.shape_cast %34 : vector<8xf32> to vector<8x1xf32>
    %cst_13 = arith.constant 3.200000e+01 : f32
    %36 = vector.broadcast %cst_13 : f32 to vector<8x1xf32>
    %37 = arith.divf %35, %36 : vector<8x1xf32>
    %38 = vector.broadcast %37 : vector<8x1xf32> to vector<8x32xf32>
    %39 = arith.subf %33, %38 : vector<8x32xf32>
    %40 = arith.mulf %39, %39 : vector<8x32xf32>
    %cst_14 = arith.constant dense<0.000000e+00> : vector<8xf32>
    %41 = vector.multi_reduction <add>, %40, %cst_14 [1] : vector<8x32xf32> to vector<8xf32>
    %42 = vector.shape_cast %41 : vector<8xf32> to vector<8x1xf32>
    %cst_15 = arith.constant 3.200000e+01 : f32
    %43 = vector.broadcast %cst_15 : f32 to vector<8x1xf32>
    %44 = arith.divf %42, %43 : vector<8x1xf32>
    %45 = vector.broadcast %37 : vector<8x1xf32> to vector<8x32xf32>
    %46 = arith.subf %33, %45 : vector<8x32xf32>
    %cst_16 = arith.constant 9.99999974E-6 : f32
    %47 = vector.broadcast %cst_16 : f32 to vector<8x1xf32>
    %48 = arith.addf %44, %47 : vector<8x1xf32>
    %49 = math.rsqrt %48 : vector<8x1xf32>
    %50 = vector.broadcast %49 : vector<8x1xf32> to vector<8x32xf32>
    %51 = arith.mulf %46, %50 : vector<8x32xf32>
    %52 = vector.broadcast %18 : vector<1x32xf32> to vector<8x32xf32>
    %53 = arith.mulf %51, %52 : vector<8x32xf32>
    %54 = vector.broadcast %21 : vector<1x32xf32> to vector<8x32xf32>
    %55 = arith.addf %53, %54 : vector<8x32xf32>
    %56 = arith.truncf %55 : vector<8x32xf32> to vector<8x32xbf16>
    %c0_17 = arith.constant 0 : index
    %c0_18 = arith.constant 0 : index
    %c0_19 = arith.constant 0 : index
    %57 = vector.load %arg4[%c0_17, %c0_18, %c0_19] : memref<2x32x2048xbf16, #tpu.memory_space<vmem>>, vector<1x32x2048xbf16>
    %58 = vector.shape_cast %57 : vector<1x32x2048xbf16> to vector<32x2048xbf16>
    %cst_20 = arith.constant dense<0.000000e+00> : vector<8x2048xf32>
    %59 = tpu.matmul %56, %58, %cst_20 {dimension_numbers = #tpu.dot_dimension_numbers<[1], [0], [0], [1], [0, 0, 1, 1], [], []>} : vector<8x32xbf16>, vector<32x2048xbf16>, vector<8x2048xf32> -> vector<8x2048xf32>
    %c0_21 = arith.constant 0 : index
    %c0_22 = arith.constant 0 : index
    %60 = vector.load %arg5[%c0_21, %c0_22] : memref<2x2048xf32, #tpu.memory_space<vmem>>, vector<1x2048xf32>
    %61 = vector.shape_cast %60 : vector<1x2048xf32> to vector<2048xf32>
    %62 = vector.shape_cast %61 : vector<2048xf32> to vector<1x2048xf32>
    %63 = vector.broadcast %62 : vector<1x2048xf32> to vector<8x2048xf32>
    %64 = arith.addf %59, %63 : vector<8x2048xf32>
    %cst_23 = arith.constant 0.000000e+00 : f32
    %65 = vector.broadcast %cst_23 : f32 to vector<8x2048xf32>
    %66 = arith.maximumf %64, %65 : vector<8x2048xf32>
    %67 = arith.truncf %66 : vector<8x2048xf32> to vector<8x2048xbf16>
    %c0_24 = arith.constant 0 : index
    %c0_25 = arith.constant 0 : index
    %c0_26 = arith.constant 0 : index
    %68 = vector.load %arg6[%c0_24, %c0_25, %c0_26] : memref<2x32x2048xbf16, #tpu.memory_space<vmem>>, vector<1x32x2048xbf16>
    %69 = vector.shape_cast %68 : vector<1x32x2048xbf16> to vector<32x2048xbf16>
    %cst_27 = arith.constant dense<0.000000e+00> : vector<8x32xf32>
    %70 = tpu.matmul %67, %69, %cst_27 {dimension_numbers = #tpu.dot_dimension_numbers<[1], [1], [0], [0], [0, 0, 1, 0], [], []>} : vector<8x2048xbf16>, vector<32x2048xbf16>, vector<8x32xf32> -> vector<8x32xf32>
    %71 = vector.broadcast %15 : vector<1x32xf32> to vector<8x32xf32>
    %72 = arith.addf %70, %71 : vector<8x32xf32>
    %73 = arith.addf %55, %72 : vector<8x32xf32>
    %cst_28 = arith.constant dense<0.000000e+00> : vector<8xf32>
    %74 = vector.multi_reduction <add>, %73, %cst_28 [1] : vector<8x32xf32> to vector<8xf32>
    %75 = vector.shape_cast %74 : vector<8xf32> to vector<8x1xf32>
    %cst_29 = arith.constant 3.200000e+01 : f32
    %76 = vector.broadcast %cst_29 : f32 to vector<8x1xf32>
    %77 = arith.divf %75, %76 : vector<8x1xf32>
    %78 = vector.broadcast %77 : vector<8x1xf32> to vector<8x32xf32>
    %79 = arith.subf %73, %78 : vector<8x32xf32>
    %80 = arith.mulf %79, %79 : vector<8x32xf32>
    %cst_30 = arith.constant dense<0.000000e+00> : vector<8xf32>
    %81 = vector.multi_reduction <add>, %80, %cst_30 [1] : vector<8x32xf32> to vector<8xf32>
    %82 = vector.shape_cast %81 : vector<8xf32> to vector<8x1xf32>
    %cst_31 = arith.constant 3.200000e+01 : f32
    %83 = vector.broadcast %cst_31 : f32 to vector<8x1xf32>
    %84 = arith.divf %82, %83 : vector<8x1xf32>
    %85 = vector.broadcast %77 : vector<8x1xf32> to vector<8x32xf32>
    %86 = arith.subf %73, %85 : vector<8x32xf32>
    %cst_32 = arith.constant 9.99999974E-6 : f32
    %87 = vector.broadcast %cst_32 : f32 to vector<8x1xf32>
    %88 = arith.addf %84, %87 : vector<8x1xf32>
    %89 = math.rsqrt %88 : vector<8x1xf32>
    %90 = vector.broadcast %89 : vector<8x1xf32> to vector<8x32xf32>
    %91 = arith.mulf %86, %90 : vector<8x32xf32>
    %92 = vector.broadcast %24 : vector<1x32xf32> to vector<8x32xf32>
    %93 = arith.mulf %91, %92 : vector<8x32xf32>
    %94 = vector.broadcast %27 : vector<1x32xf32> to vector<8x32xf32>
    %95 = arith.addf %93, %94 : vector<8x32xf32>
    %96 = vector.extract_strided_slice %1 {offsets = [1, 0, 0], sizes = [1, 1, 32], strides = [1, 1, 1]} : vector<2x6x32xf32> to vector<1x1x32xf32>
    %97 = vector.shape_cast %96 : vector<1x1x32xf32> to vector<32xf32>
    %98 = vector.shape_cast %97 : vector<32xf32> to vector<1x32xf32>
    %99 = vector.extract_strided_slice %1 {offsets = [1, 1, 0], sizes = [1, 1, 32], strides = [1, 1, 1]} : vector<2x6x32xf32> to vector<1x1x32xf32>
    %100 = vector.shape_cast %99 : vector<1x1x32xf32> to vector<32xf32>
    %101 = vector.shape_cast %100 : vector<32xf32> to vector<1x32xf32>
    %102 = vector.extract_strided_slice %1 {offsets = [1, 2, 0], sizes = [1, 1, 32], strides = [1, 1, 1]} : vector<2x6x32xf32> to vector<1x1x32xf32>
    %103 = vector.shape_cast %102 : vector<1x1x32xf32> to vector<32xf32>
    %104 = vector.shape_cast %103 : vector<32xf32> to vector<1x32xf32>
    %105 = vector.extract_strided_slice %1 {offsets = [1, 3, 0], sizes = [1, 1, 32], strides = [1, 1, 1]} : vector<2x6x32xf32> to vector<1x1x32xf32>
    %106 = vector.shape_cast %105 : vector<1x1x32xf32> to vector<32xf32>
    %107 = vector.shape_cast %106 : vector<32xf32> to vector<1x32xf32>
    %108 = vector.extract_strided_slice %1 {offsets = [1, 4, 0], sizes = [1, 1, 32], strides = [1, 1, 1]} : vector<2x6x32xf32> to vector<1x1x32xf32>
    %109 = vector.shape_cast %108 : vector<1x1x32xf32> to vector<32xf32>
    %110 = vector.shape_cast %109 : vector<32xf32> to vector<1x32xf32>
    %111 = vector.extract_strided_slice %1 {offsets = [1, 5, 0], sizes = [1, 1, 32], strides = [1, 1, 1]} : vector<2x6x32xf32> to vector<1x1x32xf32>
    %112 = vector.shape_cast %111 : vector<1x1x32xf32> to vector<32xf32>
    %113 = vector.shape_cast %112 : vector<32xf32> to vector<1x32xf32>
    %c1 = arith.constant 1 : index
    %c0_33 = arith.constant 0 : index
    %c0_34 = arith.constant 0 : index
    %114 = vector.load %arg3[%c1, %c0_33, %c0_34] : memref<2x32x32xf32, #tpu.memory_space<vmem>>, vector<1x32x32xf32>
    %115 = vector.shape_cast %114 : vector<1x32x32xf32> to vector<32x32xf32>
    %cst_35 = arith.constant dense<0.000000e+00> : vector<8x32xf32>
    %116 = tpu.matmul %95, %115, %cst_35 {dimension_numbers = #tpu.dot_dimension_numbers<[1], [0], [0], [1], [0, 0, 1, 1], [], []>} : vector<8x32xf32>, vector<32x32xf32>, vector<8x32xf32> -> vector<8x32xf32>
    %117 = vector.broadcast %98 : vector<1x32xf32> to vector<8x32xf32>
    %118 = arith.addf %116, %117 : vector<8x32xf32>
    %119 = arith.addf %95, %118 : vector<8x32xf32>
    %cst_36 = arith.constant dense<0.000000e+00> : vector<8xf32>
    %120 = vector.multi_reduction <add>, %119, %cst_36 [1] : vector<8x32xf32> to vector<8xf32>
    %121 = vector.shape_cast %120 : vector<8xf32> to vector<8x1xf32>
    %cst_37 = arith.constant 3.200000e+01 : f32
    %122 = vector.broadcast %cst_37 : f32 to vector<8x1xf32>
    %123 = arith.divf %121, %122 : vector<8x1xf32>
    %124 = vector.broadcast %123 : vector<8x1xf32> to vector<8x32xf32>
    %125 = arith.subf %119, %124 : vector<8x32xf32>
    %126 = arith.mulf %125, %125 : vector<8x32xf32>
    %cst_38 = arith.constant dense<0.000000e+00> : vector<8xf32>
    %127 = vector.multi_reduction <add>, %126, %cst_38 [1] : vector<8x32xf32> to vector<8xf32>
    %128 = vector.shape_cast %127 : vector<8xf32> to vector<8x1xf32>
    %cst_39 = arith.constant 3.200000e+01 : f32
    %129 = vector.broadcast %cst_39 : f32 to vector<8x1xf32>
    %130 = arith.divf %128, %129 : vector<8x1xf32>
    %131 = vector.broadcast %123 : vector<8x1xf32> to vector<8x32xf32>
    %132 = arith.subf %119, %131 : vector<8x32xf32>
    %cst_40 = arith.constant 9.99999974E-6 : f32
    %133 = vector.broadcast %cst_40 : f32 to vector<8x1xf32>
    %134 = arith.addf %130, %133 : vector<8x1xf32>
    %135 = math.rsqrt %134 : vector<8x1xf32>
    %136 = vector.broadcast %135 : vector<8x1xf32> to vector<8x32xf32>
    %137 = arith.mulf %132, %136 : vector<8x32xf32>
    %138 = vector.broadcast %104 : vector<1x32xf32> to vector<8x32xf32>
    %139 = arith.mulf %137, %138 : vector<8x32xf32>
    %140 = vector.broadcast %107 : vector<1x32xf32> to vector<8x32xf32>
    %141 = arith.addf %139, %140 : vector<8x32xf32>
    %142 = arith.truncf %141 : vector<8x32xf32> to vector<8x32xbf16>
    %c1_41 = arith.constant 1 : index
    %c0_42 = arith.constant 0 : index
    %c0_43 = arith.constant 0 : index
    %143 = vector.load %arg4[%c1_41, %c0_42, %c0_43] : memref<2x32x2048xbf16, #tpu.memory_space<vmem>>, vector<1x32x2048xbf16>
    %144 = vector.shape_cast %143 : vector<1x32x2048xbf16> to vector<32x2048xbf16>
    %cst_44 = arith.constant dense<0.000000e+00> : vector<8x2048xf32>
    %145 = tpu.matmul %142, %144, %cst_44 {dimension_numbers = #tpu.dot_dimension_numbers<[1], [0], [0], [1], [0, 0, 1, 1], [], []>} : vector<8x32xbf16>, vector<32x2048xbf16>, vector<8x2048xf32> -> vector<8x2048xf32>
    %c1_45 = arith.constant 1 : index
    %c0_46 = arith.constant 0 : index
    %146 = vector.load %arg5[%c1_45, %c0_46] : memref<2x2048xf32, #tpu.memory_space<vmem>>, vector<1x2048xf32>
    %147 = vector.shape_cast %146 : vector<1x2048xf32> to vector<2048xf32>
    %148 = vector.shape_cast %147 : vector<2048xf32> to vector<1x2048xf32>
    %149 = vector.broadcast %148 : vector<1x2048xf32> to vector<8x2048xf32>
    %150 = arith.addf %145, %149 : vector<8x2048xf32>
    %cst_47 = arith.constant 0.000000e+00 : f32
    %151 = vector.broadcast %cst_47 : f32 to vector<8x2048xf32>
    %152 = arith.maximumf %150, %151 : vector<8x2048xf32>
    %153 = arith.truncf %152 : vector<8x2048xf32> to vector<8x2048xbf16>
    %c1_48 = arith.constant 1 : index
    %c0_49 = arith.constant 0 : index
    %c0_50 = arith.constant 0 : index
    %154 = vector.load %arg6[%c1_48, %c0_49, %c0_50] : memref<2x32x2048xbf16, #tpu.memory_space<vmem>>, vector<1x32x2048xbf16>
    %155 = vector.shape_cast %154 : vector<1x32x2048xbf16> to vector<32x2048xbf16>
    %cst_51 = arith.constant dense<0.000000e+00> : vector<8x32xf32>
    %156 = tpu.matmul %153, %155, %cst_51 {dimension_numbers = #tpu.dot_dimension_numbers<[1], [1], [0], [0], [0, 0, 1, 0], [], []>} : vector<8x2048xbf16>, vector<32x2048xbf16>, vector<8x32xf32> -> vector<8x32xf32>
    %157 = vector.broadcast %101 : vector<1x32xf32> to vector<8x32xf32>
    %158 = arith.addf %156, %157 : vector<8x32xf32>
    %159 = arith.addf %141, %158 : vector<8x32xf32>
    %cst_52 = arith.constant dense<0.000000e+00> : vector<8xf32>
    %160 = vector.multi_reduction <add>, %159, %cst_52 [1] : vector<8x32xf32> to vector<8xf32>
    %161 = vector.shape_cast %160 : vector<8xf32> to vector<8x1xf32>
    %cst_53 = arith.constant 3.200000e+01 : f32
    %162 = vector.broadcast %cst_53 : f32 to vector<8x1xf32>
    %163 = arith.divf %161, %162 : vector<8x1xf32>
    %164 = vector.broadcast %163 : vector<8x1xf32> to vector<8x32xf32>
    %165 = arith.subf %159, %164 : vector<8x32xf32>
    %166 = arith.mulf %165, %165 : vector<8x32xf32>
    %cst_54 = arith.constant dense<0.000000e+00> : vector<8xf32>
    %167 = vector.multi_reduction <add>, %166, %cst_54 [1] : vector<8x32xf32> to vector<8xf32>
    %168 = vector.shape_cast %167 : vector<8xf32> to vector<8x1xf32>
    %cst_55 = arith.constant 3.200000e+01 : f32
    %169 = vector.broadcast %cst_55 : f32 to vector<8x1xf32>
    %170 = arith.divf %168, %169 : vector<8x1xf32>
    %171 = vector.broadcast %163 : vector<8x1xf32> to vector<8x32xf32>
    %172 = arith.subf %159, %171 : vector<8x32xf32>
    %cst_56 = arith.constant 9.99999974E-6 : f32
    %173 = vector.broadcast %cst_56 : f32 to vector<8x1xf32>
    %174 = arith.addf %170, %173 : vector<8x1xf32>
    %175 = math.rsqrt %174 : vector<8x1xf32>
    %176 = vector.broadcast %175 : vector<8x1xf32> to vector<8x32xf32>
    %177 = arith.mulf %172, %176 : vector<8x32xf32>
    %178 = vector.broadcast %110 : vector<1x32xf32> to vector<8x32xf32>
    %179 = arith.mulf %177, %178 : vector<8x32xf32>
    %180 = vector.broadcast %113 : vector<1x32xf32> to vector<8x32xf32>
    %181 = arith.addf %179, %180 : vector<8x32xf32>
    %182 = vector.extract_strided_slice %0 {offsets = [1, 0], sizes = [1, 32], strides = [1, 1]} : vector<3x32xf32> to vector<1x32xf32>
    %183 = vector.shape_cast %182 : vector<1x32xf32> to vector<32xf32>
    %184 = vector.shape_cast %183 : vector<32xf32> to vector<1x32xf32>
    %185 = vector.broadcast %184 : vector<1x32xf32> to vector<8x32xf32>
    %186 = arith.mulf %181, %185 : vector<8x32xf32>
    %cst_57 = arith.constant dense<0.000000e+00> : vector<8xf32>
    %187 = vector.multi_reduction <add>, %186, %cst_57 [1] : vector<8x32xf32> to vector<8xf32>
    %188 = vector.shape_cast %187 : vector<8xf32> to vector<8x1xf32>
    %189 = vector.extract_strided_slice %0 {offsets = [2, 0], sizes = [1, 1], strides = [1, 1]} : vector<3x32xf32> to vector<1x1xf32>
    %190 = vector.extract %189[0, 0] : f32 from vector<1x1xf32>
    %191 = vector.broadcast %190 : f32 to vector<8x1xf32>
    %192 = arith.addf %188, %191 : vector<8x1xf32>
    %193 = vector.shape_cast %192 : vector<8x1xf32> to vector<8x1xf32>
    %194 = vector.broadcast %193 : vector<8x1xf32> to vector<8x128xf32>
    %c0_58 = arith.constant 0 : index
    %c0_59 = arith.constant 0 : index
    %195 = vector.load %arg9[%c0_58, %c0_59] : memref<8x128xf32, #tpu.memory_space<vmem>>, vector<8x128xf32>
    tpu.vector_store %arg9[%c0_58, %c0_59], %194 {strides = array<i32>} : memref<8x128xf32, #tpu.memory_space<vmem>>, vector<8x128xf32>,
    return
  }
  func.func @transform_0(%arg0: i32) -> (i32, i32) {
    %c0_i32 = arith.constant 0 : i32
    %c0_i32_0 = arith.constant 0 : i32
    return %arg0, %c0_i32 : i32, i32
  }
  func.func @transform_1(%arg0: i32) -> (i32, i32) {
    %c0_i32 = arith.constant 0 : i32
    %c0_i32_0 = arith.constant 0 : i32
    %c0_i32_1 = arith.constant 0 : i32
    return %c0_i32, %c0_i32_0 : i32, i32
  }
  func.func @transform_2(%arg0: i32) -> (i32, i32, i32) {
    %c0_i32 = arith.constant 0 : i32
    %c0_i32_0 = arith.constant 0 : i32
    %c0_i32_1 = arith.constant 0 : i32
    %c0_i32_2 = arith.constant 0 : i32
    return %c0_i32, %c0_i32_0, %c0_i32_1 : i32, i32, i32
  }
  func.func @transform_3(%arg0: i32) -> (i32, i32, i32) {
    %c0_i32 = arith.constant 0 : i32
    %c0_i32_0 = arith.constant 0 : i32
    %c0_i32_1 = arith.constant 0 : i32
    %c0_i32_2 = arith.constant 0 : i32
    return %c0_i32, %c0_i32_0, %c0_i32_1 : i32, i32, i32
  }
  func.func @transform_4(%arg0: i32) -> (i32, i32) {
    %c0_i32 = arith.constant 0 : i32
    %c0_i32_0 = arith.constant 0 : i32
    %c0_i32_1 = arith.constant 0 : i32
    return %c0_i32, %c0_i32_0 : i32, i32
  }
  func.func @transform_5(%arg0: i32) -> (i32, i32, i32) {
    %c0_i32 = arith.constant 0 : i32
    %c0_i32_0 = arith.constant 0 : i32
    %c0_i32_1 = arith.constant 0 : i32
    %c0_i32_2 = arith.constant 0 : i32
    return %c0_i32, %c0_i32_0, %c0_i32_1 : i32, i32, i32
  }
  func.func @transform_6(%arg0: i32) -> (i32, i32, i32) {
    %c0_i32 = arith.constant 0 : i32
    %c0_i32_0 = arith.constant 0 : i32
    %c0_i32_1 = arith.constant 0 : i32
    %c0_i32_2 = arith.constant 0 : i32
    return %c0_i32, %c0_i32_0, %c0_i32_1 : i32, i32, i32
  }
  func.func @transform_7(%arg0: i32) -> (i32, i32) {
    %c0_i32 = arith.constant 0 : i32
    %c0_i32_0 = arith.constant 0 : i32
    %c0_i32_1 = arith.constant 0 : i32
    return %c0_i32, %c0_i32_0 : i32, i32
  }
  func.func @transform_8(%arg0: i32) -> (i32, i32) {
    %c0_i32 = arith.constant 0 : i32
    %c0_i32_0 = arith.constant 0 : i32
    return %arg0, %c0_i32 : i32, i32
  }
}

</mosaic_0001>

<llo_original>
// kernel: tpu_custom_call.1
$region0: #{tpu_custom_call.1}
  #allocation0 [shape = 'u32[]', space=smem, size = 0x4, offset = 0x4, fixed_abs, tag = 'smem constant byte address 0x4 - core index']
  #allocation1 [shape = 'u32[144,128]{1,0:T(1,128)}', space=vmem, size = 0x12000, scoped, tag = 'internal scratch']
  %s0 = inlined_call_operand.hbm [shape: f32[8,16], index: 0, kind: input, shape index: {}]
  %s1 = inlined_call_operand.hbm [shape: f32[16,32], index: 1, kind: input, shape index: {}]
  %s2 = inlined_call_operand.hbm [shape: f32[2,32,32], index: 2, kind: input, shape index: {}]
  %s3 = inlined_call_operand.hbm [shape: bf16[2,32,2048], index: 3, kind: input, shape index: {}]
  %s4 = inlined_call_operand.vmem [shape: f32[2,2048], index: 4, kind: input, shape index: {}]
  %s5 = inlined_call_operand.hbm [shape: bf16[2,32,2048], index: 5, kind: input, shape index: {}]
  %s6 = inlined_call_operand.vmem [shape: f32[2,6,32], index: 6, kind: input, shape index: {}]
  %s7 = inlined_call_operand.vmem [shape: f32[3,32], index: 7, kind: input, shape index: {}]
  %s8 = inlined_call_operand.hbm [shape: f32[8,128], index: 8, kind: output, shape index: {}]
  %s9 = sld [smem:[#allocation0]]
  $region62: #{tpu_custom_call.1} parent=0
    _
  %s11 = ssub.s32 1, %s9
  %s12 = scalar_select 0, %s11, %s9
  $region1: #{tpu_custom_call.1} parent=0
    #allocation2 [shape = 'u8[4096]{0}', space=vmem, size = 0x1000, scoped, tag = 'input window, operand 0, single buffered']
    #allocation3 [shape = 's32[1]{0}', space=sflag, size = 0x4, scoped, tag = 'scoped memory for tpu_custom_call.1']
    #allocation4 [shape = 's32[1]{0}', space=sflag, size = 0x4, scoped, tag = 'scoped memory for tpu_custom_call.1']
    #allocation5 [shape = 'u8[8192]{0}', space=vmem, size = 0x2000, scoped, tag = 'input window, operand 1, single buffered']
    #allocation6 [shape = 's32[1]{0}', space=sflag, size = 0x4, scoped, tag = 'scoped memory for tpu_custom_call.1']
    #allocation7 [shape = 'u8[32768]{0}', space=vmem, size = 0x8000, scoped, tag = 'input window, operand 2, single buffered']
    #allocation8 [shape = 'u8[262144]{0}', space=vmem, size = 0x40000, scoped, tag = 'input window, operand 3, single buffered']
    #allocation9 [shape = 's32[1]{0}', space=sflag, size = 0x4, scoped, tag = 'scoped memory for tpu_custom_call.1']
    #allocation10 [shape = 'u8[262144]{0}', space=vmem, size = 0x40000, scoped, tag = 'input window, operand 5, single buffered']
    #allocation11 [shape = 'u8[4096]{0}', space=vmem, size = 0x1000, scoped, tag = 'output window, operand 0, single buffered']
    %13 = vsyncpa [#allocation3], 0
    %14 = vsyncpa [#allocation6], 0
    %15 = vsyncpa [#allocation9], 0
    %16 = vsyncpa [#allocation4], 0
    // Predicated region
    $region2: #{tpu_custom_call.1} parent=1 // pred_check
      _
    $region3: #{tpu_custom_call.1} parent=1 // pred_check_branch
      %18 = sbr.rel (0) target = $region5
    $region4: #{tpu_custom_call.1} parent=1 // pred_region
      %s20 = ssub.s32 128, 128
      %21 = vsyncadd [#allocation3], %s20
      %s23 = sshll.u32 [#allocation2], 4
      %s24 = int_to_ptr.vmem [resolvable:$true] %s23
      %26 = dma.hbm_to_vmem [thread:$0]  %s0, 128, %s24, [#allocation3]
    $region5: #{tpu_custom_call.1} parent=1 // pred_fallthru
      _
    // Predicated region
    $region6: #{tpu_custom_call.1} parent=1 // pred_check
      _
    $region7: #{tpu_custom_call.1} parent=1 // pred_check_branch
      %28 = sbr.rel (0) target = $region9
    $region8: #{tpu_custom_call.1} parent=1 // pred_region
      %s30 = ssub.s32 256, 256
      %31 = vsyncadd [#allocation6], %s30
      %s32 = sshll.u32 [#allocation5], 4
      %s33 = int_to_ptr.vmem [resolvable:$true] %s32
      %38 = dma.hbm_to_vmem [thread:$0]  %s1, 256, %s33, [#allocation6], 128, 128, 8
    $region9: #{tpu_custom_call.1} parent=1 // pred_fallthru
      _
    // Predicated region
    $region10: #{tpu_custom_call.1} parent=1 // pred_check
      _
    $region11: #{tpu_custom_call.1} parent=1 // pred_check_branch
      %40 = sbr.rel (0) target = $region13
    $region12: #{tpu_custom_call.1} parent=1 // pred_region
      %s42 = ssub.s32 1024, 1024
      %43 = vsyncadd [#allocation6], %s42
      %s44 = sshll.u32 [#allocation7], 4
      %s45 = int_to_ptr.vmem [resolvable:$true] %s44
      %50 = dma.hbm_to_vmem [thread:$0]  %s2, 1024, %s45, [#allocation6], 128, 128, 8
    $region13: #{tpu_custom_call.1} parent=1 // pred_fallthru
      _
    // Predicated region
    $region14: #{tpu_custom_call.1} parent=1 // pred_check
      _
    $region15: #{tpu_custom_call.1} parent=1 // pred_check_branch
      %52 = sbr.rel (0) target = $region17
    $region16: #{tpu_custom_call.1} parent=1 // pred_region
      %s54 = ssub.s32 8192, 8192
      %55 = vsyncadd [#allocation9], %s54
      %s56 = sshll.u32 [#allocation8], 4
      %s57 = int_to_ptr.vmem [resolvable:$true] %s56
      %62 = dma.hbm_to_vmem [thread:$0]  %s3, 8192, %s57, [#allocation9], 1024, 1024, 64
    $region17: #{tpu_custom_call.1} parent=1 // pred_fallthru
      _
    // Predicated region
    $region18: #{tpu_custom_call.1} parent=1 // pred_check
      _
    $region19: #{tpu_custom_call.1} parent=1 // pred_check_branch
      %64 = sbr.rel (0) target = $region21
    $region20: #{tpu_custom_call.1} parent=1 // pred_region
      _
    $region21: #{tpu_custom_call.1} parent=1 // pred_fallthru
      _
    // Predicated region
    $region22: #{tpu_custom_call.1} parent=1 // pred_check
      _
    $region23: #{tpu_custom_call.1} parent=1 // pred_check_branch
      %66 = sbr.rel (0) target = $region25
    $region24: #{tpu_custom_call.1} parent=1 // pred_region
      %s68 = ssub.s32 8192, 8192
      %69 = vsyncadd [#allocation9], %s68
      %s70 = sshll.u32 [#allocation10], 4
      %s71 = int_to_ptr.vmem [resolvable:$true] %s70
      %76 = dma.hbm_to_vmem [thread:$0]  %s5, 8192, %s71, [#allocation9], 1024, 1024, 64
    $region25: #{tpu_custom_call.1} parent=1 // pred_fallthru
      _
    // Predicated region
    $region26: #{tpu_custom_call.1} parent=1 // pred_check
      _
    $region27: #{tpu_custom_call.1} parent=1 // pred_check_branch
      %78 = sbr.rel (0) target = $region29
    $region28: #{tpu_custom_call.1} parent=1 // pred_region
      _
    $region29: #{tpu_custom_call.1} parent=1 // pred_fallthru
      _
    // Predicated region
    $region30: #{tpu_custom_call.1} parent=1 // pred_check
      _
    $region31: #{tpu_custom_call.1} parent=1 // pred_check_branch
      %80 = sbr.rel (0) target = $region33
    $region32: #{tpu_custom_call.1} parent=1 // pred_region
      _
    $region33: #{tpu_custom_call.1} parent=1 // pred_fallthru
      _
    // Predicated region
    $region34: #{tpu_custom_call.1} parent=1 // pred_check
      _
    $region35: #{tpu_custom_call.1} parent=1 // pred_check_branch
      %82 = sbr.rel (0) target = $region37
    $region36: #{tpu_custom_call.1} parent=1 // pred_region
      %83 = dma.done [#allocation3], 128
    $region37: #{tpu_custom_call.1} parent=1 // pred_fallthru
      _
    // Predicated region
    $region38: #{tpu_custom_call.1} parent=1 // pred_check
      _
    $region39: #{tpu_custom_call.1} parent=1 // pred_check_branch
      %85 = sbr.rel (0) target = $region41
    $region40: #{tpu_custom_call.1} parent=1 // pred_region
      %86 = dma.done [#allocation6], 256
    $region41: #{tpu_custom_call.1} parent=1 // pred_fallthru
      _
    // Predicated region
    $region42: #{tpu_custom_call.1} parent=1 // pred_check
      _
    $region43: #{tpu_custom_call.1} parent=1 // pred_check_branch
      %88 = sbr.rel (0) target = $region45
    $region44: #{tpu_custom_call.1} parent=1 // pred_region
      %89 = dma.done [#allocation6], 1024
    $region45: #{tpu_custom_call.1} parent=1 // pred_fallthru
      _
    // Predicated region
    $region46: #{tpu_custom_call.1} parent=1 // pred_check
      _
    $region47: #{tpu_custom_call.1} parent=1 // pred_check_branch
      %91 = sbr.rel (0) target = $region49
    $region48: #{tpu_custom_call.1} parent=1 // pred_region
      %92 = dma.done [#allocation9], 8192
    $region49: #{tpu_custom_call.1} parent=1 // pred_fallthru
      _
    // Predicated region
    $region50: #{tpu_custom_call.1} parent=1 // pred_check
      _
    $region51: #{tpu_custom_call.1} parent=1 // pred_check_branch
      %94 = sbr.rel (0) target = $region53
    $region52: #{tpu_custom_call.1} parent=1 // pred_region
      %95 = dma.done [#allocation9], 8192
    $region53: #{tpu_custom_call.1} parent=1 // pred_fallthru
      _
    %v97 = vld [vmem:[%s7] sm:$0x7]
    %v98 = vld [vmem:[%s6] sm:$0x3f]
    %v99 = vld [vmem:[%s6 + $0x8] sm:$0x3f]
    %v100 = vld [vmem:[#allocation2] sm:$0xff]
    %v101 = vld [vmem:[#allocation5] sm:$0xff]
    %v102 = vld [vmem:[#allocation5 + $0x8] sm:$0xff]
    %v103 = vlaneseq
    %v104 = vshrl.u32 %v103, 7
    %v105 = vsub.s32 0, %v104
    %v106 = vrot.slane %v97, %v105
    %vm107 = vcmask 130048
    %v109 = vsel %vm107, %v100, 0
    %111 = vmatprep.subr.mxu0 0.0
    %112 = vmatpush1.msra.mxu0 %v101
    %113 = vmatprep.subr.mxu0 0.0
    %114 = vmatpush1.msra.mxu0 %v102
    %115 = vmatprep.subr.mxu0 0.0
    %116 = vmatpush1.msra.mxu0 0.0
    %117 = vmatprep.subr.mxu0 0.0
    %118 = vmatpush1.msra.mxu0 0.0
    %119 = vmatprep.subr.mxu0 0.0
    %120 = vmatpush1.msra.mxu0 0.0
    %121 = vmatprep.subr.mxu0 0.0
    %122 = vmatpush1.msra.mxu0 0.0
    %123 = vmatprep.subr.mxu0 0.0
    %124 = vmatpush1.msra.mxu0 0.0
    %125 = vmatprep.subr.mxu0 0.0
    %126 = vmatpush1.msra.mxu0 0.0
    %127 = vmatprep.subr.mxu0 0.0
    %128 = vmatpush1.msra.mxu0 0.0
    %129 = vmatprep.subr.mxu0 0.0
    %130 = vmatpush1.msra.mxu0 0.0
    %131 = vmatprep.subr.mxu0 0.0
    %132 = vmatpush1.msra.mxu0 0.0
    %133 = vmatprep.subr.mxu0 0.0
    %134 = vmatpush1.msra.mxu0 0.0
    %135 = vmatprep.subr.mxu0 0.0
    %136 = vmatpush1.msra.mxu0 0.0
    %137 = vmatprep.subr.mxu0 0.0
    %138 = vmatpush1.msra.mxu0 0.0
    %139 = vmatprep.subr.mxu0 0.0
    %140 = vmatpush1.msra.mxu0 0.0
    %141 = vmatprep.subr.mxu0 0.0
    %142 = vmatpush1.msra.mxu0 0.0
    %143 = vmatprep.subr.mxu0 0.0
    %144 = vmatpush1.msra.mxu0 0.0
    %145 = vmatprep.subr.mxu0 0.0
    %146 = vmatpush1.msra.mxu0 0.0
    %147 = vmatprep.subr.mxu0 0.0
    %148 = vmatpush1.msra.mxu0 0.0
    %149 = vmatprep.subr.mxu0 0.0
    %150 = vmatpush1.msra.mxu0 0.0
    %151 = vmatprep.subr.mxu0 0.0
    %152 = vmatpush1.msra.mxu0 0.0
    %153 = vmatprep.subr.mxu0 0.0
    %154 = vmatpush1.msra.mxu0 0.0
    %155 = vmatprep.subr.mxu0 0.0
    %156 = vmatpush1.msra.mxu0 0.0
    %157 = vmatprep.subr.mxu0 0.0
    %158 = vmatpush1.msra.mxu0 0.0
    %159 = vmatprep.subr.mxu0 0.0
    %160 = vmatpush1.msra.mxu0 0.0
    %161 = vmatprep.subr.mxu0 0.0
    %162 = vmatpush1.msra.mxu0 0.0
    %163 = vmatprep.subr.mxu0 0.0
    %164 = vmatpush1.msra.mxu0 0.0
    %165 = vmatprep.subr.mxu0 0.0
    %166 = vmatpush1.msra.mxu0 0.0
    %167 = vmatprep.subr.mxu0 0.0
    %168 = vmatpush1.msra.mxu0 0.0
    %169 = vmatprep.subr.mxu0 0.0
    %170 = vmatpush1.msra.mxu0 0.0
    %171 = vmatprep.subr.mxu0 0.0
    %172 = vmatpush1.msra.mxu0 0.0
    %173 = vmatprep.subr.mxu0 0.0
    %174 = vmatpush1.msra.mxu0 0.0
    %175 = vmatprep.mubr.f32.mxu0 0.0
    %176 = vmatmul.mubr.f32.gmra.mrb[0].mxu0 %v109
    %v177 = vpop.f32.mrb[0].mxu0
    %v178 = vadd.f32 %v106, %v177
    %v179 = vpop.f32.mrb[0].mxu0
    %180 = vdwg.mxu0
    %v181 = vld [vmem:[#allocation7] sm:$0xff]
    %v182 = vld [vmem:[#allocation7 + $0x8] sm:$0xff]
    %v183 = vld [vmem:[#allocation7 + $0x10] sm:$0xff]
    %v184 = vld [vmem:[#allocation7 + $0x18] sm:$0xff]
    %v185 = vlaneseq
    %v186 = vshrl.u32 %v185, 7
    %v187 = vsub.s32 0, %v186
    %v188 = vrot.slane %v98, %v187
    %vm189 = vcmask 261120
    %v191 = vsel %vm189, %v178, 0
    %193 = vmatprep.subr.mxu0 0.0
    %194 = vmatpush1.msra.mxu0 %v181
    %195 = vmatprep.subr.mxu0 0.0
    %196 = vmatpush1.msra.mxu0 %v182
    %197 = vmatprep.subr.mxu0 0.0
    %198 = vmatpush1.msra.mxu0 %v183
    %199 = vmatprep.subr.mxu0 0.0
    %200 = vmatpush1.msra.mxu0 %v184
    %201 = vmatprep.subr.mxu0 0.0
    %202 = vmatpush1.msra.mxu0 0.0
    %203 = vmatprep.subr.mxu0 0.0
    %204 = vmatpush1.msra.mxu0 0.0
    %205 = vmatprep.subr.mxu0 0.0
    %206 = vmatpush1.msra.mxu0 0.0
    %207 = vmatprep.subr.mxu0 0.0
    %208 = vmatpush1.msra.mxu0 0.0
    %209 = vmatprep.subr.mxu0 0.0
    %210 = vmatpush1.msra.mxu0 0.0
    %211 = vmatprep.subr.mxu0 0.0
    %212 = vmatpush1.msra.mxu0 0.0
    %213 = vmatprep.subr.mxu0 0.0
    %214 = vmatpush1.msra.mxu0 0.0
    %215 = vmatprep.subr.mxu0 0.0
    %216 = vmatpush1.msra.mxu0 0.0
    %217 = vmatprep.subr.mxu0 0.0
    %218 = vmatpush1.msra.mxu0 0.0
    %219 = vmatprep.subr.mxu0 0.0
    %220 = vmatpush1.msra.mxu0 0.0
    %221 = vmatprep.subr.mxu0 0.0
    %222 = vmatpush1.msra.mxu0 0.0
    %223 = vmatprep.subr.mxu0 0.0
    %224 = vmatpush1.msra.mxu0 0.0
    %225 = vmatprep.subr.mxu0 0.0
    %226 = vmatpush1.msra.mxu0 0.0
    %227 = vmatprep.subr.mxu0 0.0
    %228 = vmatpush1.msra.mxu0 0.0
    %229 = vmatprep.subr.mxu0 0.0
    %230 = vmatpush1.msra.mxu0 0.0
    %231 = vmatprep.subr.mxu0 0.0
    %232 = vmatpush1.msra.mxu0 0.0
    %233 = vmatprep.subr.mxu0 0.0
    %234 = vmatpush1.msra.mxu0 0.0
    %235 = vmatprep.subr.mxu0 0.0
    %236 = vmatpush1.msra.mxu0 0.0
    %237 = vmatprep.subr.mxu0 0.0
    %238 = vmatpush1.msra.mxu0 0.0
    %239 = vmatprep.subr.mxu0 0.0
    %240 = vmatpush1.msra.mxu0 0.0
    %241 = vmatprep.subr.mxu0 0.0
    %242 = vmatpush1.msra.mxu0 0.0
    %243 = vmatprep.subr.mxu0 0.0
    %244 = vmatpush1.msra.mxu0 0.0
    %245 = vmatprep.subr.mxu0 0.0
    %246 = vmatpush1.msra.mxu0 0.0
    %247 = vmatprep.subr.mxu0 0.0
    %248 = vmatpush1.msra.mxu0 0.0
    %249 = vmatprep.subr.mxu0 0.0
    %250 = vmatpush1.msra.mxu0 0.0
    %251 = vmatprep.subr.mxu0 0.0
    %252 = vmatpush1.msra.mxu0 0.0
    %253 = vmatprep.subr.mxu0 0.0
    %254 = vmatpush1.msra.mxu0 0.0
    %255 = vmatprep.subr.mxu0 0.0
    %256 = vmatpush1.msra.mxu0 0.0
    %257 = vmatprep.mubr.f32.mxu0 0.0
    %258 = vmatmul.mubr.f32.gmra.mrb[0].mxu0 %v191
    %v259 = vpop.f32.mrb[0].mxu0
    %v260 = vadd.f32 %v188, %v259
    %v261 = vpop.f32.mrb[0].mxu0
    %262 = vdwg.mxu0
    %v263 = vadd.f32 %v178, %v260
    %v264 = vsel %vm189, %v263, 0.0
    %265 = vadd.xlane.f32.xlu0 %v264
    %v266 = vpop.xlane.xlu0 %265
    %v267 = vrcp.pop 32.0
    %v268 = vmul.f32 %v266, %v267
    %v269 = vsub.f32 %v263, %v268
    %v270 = vmul.f32 %v269, %v269
    %v271 = vsel %vm189, %v270, 0.0
    %272 = vadd.xlane.f32.xlu0 %v271
    %v273 = vpop.xlane.xlu0 %272
    %v274 = vmul.f32 %v273, %v267
    %v275 = vadd.f32 %v274, 1e-05
    %v276 = vrsqrt.pop %v275
    %v277 = vmul.f32 %v269, %v276
    %v278 = vlaneseq
    %v279 = vshrl.u32 %v278, 7
    %v280 = vsub.s32 2, %v279
    %v281 = vrot.slane %v98, %v280
    %v282 = vmul.f32 %v277, %v281
    %v283 = vlaneseq
    %v284 = vshrl.u32 %v283, 7
    %v285 = vsub.s32 3, %v284
    %v286 = vrot.slane %v98, %v285
    %v287 = vadd.f32 %v282, %v286
    %v288 = vpack.c.bf16 %v287, %v287
    %v289 = vld [vmem:[#allocation8] sm:$0xff]
    %v290 = vld [vmem:[#allocation8 + $0x8] sm:$0xff]
    %v291 = vld [vmem:[#allocation8 + $0x10] sm:$0xff]
    %v292 = vld [vmem:[#allocation8 + $0x18] sm:$0xff]
    %v293 = vld [vmem:[#allocation8 + $0x20] sm:$0xff]
    %v294 = vld [vmem:[#allocation8 + $0x28] sm:$0xff]
    %v295 = vld [vmem:[#allocation8 + $0x30] sm:$0xff]
    %v296 = vld [vmem:[#allocation8 + $0x38] sm:$0xff]
    %v297 = vld [vmem:[#allocation8 + $0x40] sm:$0xff]
    %v298 = vld [vmem:[#allocation8 + $0x48] sm:$0xff]
    %v299 = vld [vmem:[#allocation8 + $0x50] sm:$0xff]
    %v300 = vld [vmem:[#allocation8 + $0x58] sm:$0xff]
    %v301 = vld [vmem:[#allocation8 + $0x60] sm:$0xff]
    %v302 = vld [vmem:[#allocation8 + $0x68] sm:$0xff]
    %v303 = vld [vmem:[#allocation8 + $0x70] sm:$0xff]
    %v304 = vld [vmem:[#allocation8 + $0x78] sm:$0xff]
    %v305 = vld [vmem:[#allocation8 + $0x80] sm:$0xff]
    %v306 = vld [vmem:[#allocation8 + $0x88] sm:$0xff]
    %v307 = vld [vmem:[#allocation8 + $0x90] sm:$0xff]
    %v308 = vld [vmem:[#allocation8 + $0x98] sm:$0xff]
    %v309 = vld [vmem:[#allocation8 + $0xa0] sm:$0xff]
    %v310 = vld [vmem:[#allocation8 + $0xa8] sm:$0xff]
    %v311 = vld [vmem:[#allocation8 + $0xb0] sm:$0xff]
    %v312 = vld [vmem:[#allocation8 + $0xb8] sm:$0xff]
    %v313 = vld [vmem:[#allocation8 + $0xc0] sm:$0xff]
    %v314 = vld [vmem:[#allocation8 + $0xc8] sm:$0xff]
    %v315 = vld [vmem:[#allocation8 + $0xd0] sm:$0xff]
    %v316 = vld [vmem:[#allocation8 + $0xd8] sm:$0xff]
    %v317 = vld [vmem:[#allocation8 + $0xe0] sm:$0xff]
    %v318 = vld [vmem:[#allocation8 + $0xe8] sm:$0xff]
    %v319 = vld [vmem:[#allocation8 + $0xf0] sm:$0xff]
    %v320 = vld [vmem:[#allocation8 + $0xf8] sm:$0xff]
    %v321 = vld [vmem:[%s4] ss:$2 sm:$0xff]
    %s322 = scalar_lea.vmem %s4, 16
    %v323 = vld [vmem:[%s322] ss:$2 sm:$0xff]
    %v326 = vlaneseq
    %v327 = vshrl.u32 %v326, 7
    %v328 = vsub.s32 0, %v327
    %v329 = vrot.slane %v321, %v328
    %v330 = vlaneseq
    %v331 = vshrl.u32 %v330, 7
    %v332 = vsub.s32 1, %v331
    %v333 = vrot.slane %v321, %v332
    %v334 = vlaneseq
    %v335 = vshrl.u32 %v334, 7
    %v336 = vsub.s32 2, %v335
    %v337 = vrot.slane %v321, %v336
    %v338 = vlaneseq
    %v339 = vshrl.u32 %v338, 7
    %v340 = vsub.s32 3, %v339
    %v341 = vrot.slane %v321, %v340
    %v342 = vlaneseq
    %v343 = vshrl.u32 %v342, 7
    %v344 = vsub.s32 4, %v343
    %v345 = vrot.slane %v321, %v344
    %v346 = vlaneseq
    %v347 = vshrl.u32 %v346, 7
    %v348 = vsub.s32 5, %v347
    %v349 = vrot.slane %v321, %v348
    %v350 = vlaneseq
    %v351 = vshrl.u32 %v350, 7
    %v352 = vsub.s32 6, %v351
    %v353 = vrot.slane %v321, %v352
    %v354 = vlaneseq
    %v355 = vshrl.u32 %v354, 7
    %v356 = vsub.s32 7, %v355
    %v357 = vrot.slane %v321, %v356
    %v358 = vlaneseq
    %v359 = vshrl.u32 %v358, 7
    %v360 = vsub.s32 0, %v359
    %v361 = vrot.slane %v323, %v360
    %v362 = vlaneseq
    %v363 = vshrl.u32 %v362, 7
    %v364 = vsub.s32 1, %v363
    %v365 = vrot.slane %v323, %v364
    %v366 = vlaneseq
    %v367 = vshrl.u32 %v366, 7
    %v368 = vsub.s32 2, %v367
    %v369 = vrot.slane %v323, %v368
    %v370 = vlaneseq
    %v371 = vshrl.u32 %v370, 7
    %v372 = vsub.s32 3, %v371
    %v373 = vrot.slane %v323, %v372
    %v374 = vlaneseq
    %v375 = vshrl.u32 %v374, 7
    %v376 = vsub.s32 4, %v375
    %v377 = vrot.slane %v323, %v376
    %v378 = vlaneseq
    %v379 = vshrl.u32 %v378, 7
    %v380 = vsub.s32 5, %v379
    %v381 = vrot.slane %v323, %v380
    %v382 = vlaneseq
    %v383 = vshrl.u32 %v382, 7
    %v384 = vsub.s32 6, %v383
    %v385 = vrot.slane %v323, %v384
    %v386 = vlaneseq
    %v387 = vshrl.u32 %v386, 7
    %v388 = vsub.s32 7, %v387
    %v389 = vrot.slane %v323, %v388
    %v438 = vunpack.c.l.b16 %v289
    %v439 = vunpack.c.h.b16 %v289
    %v440 = vunpack.c.l.b16 %v290
    %v441 = vunpack.c.h.b16 %v290
    %v442 = vunpack.c.l.b16 %v291
    %v443 = vunpack.c.h.b16 %v291
    %v444 = vunpack.c.l.b16 %v292
    %v445 = vunpack.c.h.b16 %v292
    %v446 = vunpack.c.l.b16 %v293
    %v447 = vunpack.c.h.b16 %v293
    %v448 = vunpack.c.l.b16 %v294
    %v449 = vunpack.c.h.b16 %v294
    %v450 = vunpack.c.l.b16 %v295
    %v451 = vunpack.c.h.b16 %v295
    %v452 = vunpack.c.l.b16 %v296
    %v453 = vunpack.c.h.b16 %v296
    %v454 = vunpack.c.l.b16 %v297
    %v455 = vunpack.c.h.b16 %v297
    %v456 = vunpack.c.l.b16 %v298
    %v457 = vunpack.c.h.b16 %v298
    %v458 = vunpack.c.l.b16 %v299
    %v459 = vunpack.c.h.b16 %v299
    %v460 = vunpack.c.l.b16 %v300
    %v461 = vunpack.c.h.b16 %v300
    %v462 = vunpack.c.l.b16 %v301
    %v463 = vunpack.c.h.b16 %v301
    %v464 = vunpack.c.l.b16 %v302
    %v465 = vunpack.c.h.b16 %v302
    %v466 = vunpack.c.l.b16 %v303
    %v467 = vunpack.c.h.b16 %v303
    %v468 = vunpack.c.l.b16 %v304
    %v469 = vunpack.c.h.b16 %v304
    %v470 = vunpack.c.l.b16 %v305
    %v471 = vunpack.c.h.b16 %v305
    %v472 = vunpack.c.l.b16 %v306
    %v473 = vunpack.c.h.b16 %v306
    %v474 = vunpack.c.l.b16 %v307
    %v475 = vunpack.c.h.b16 %v307
    %v476 = vunpack.c.l.b16 %v308
    %v477 = vunpack.c.h.b16 %v308
    %v478 = vunpack.c.l.b16 %v309
    %v479 = vunpack.c.h.b16 %v309
    %v480 = vunpack.c.l.b16 %v310
    %v481 = vunpack.c.h.b16 %v310
    %v482 = vunpack.c.l.b16 %v311
    %v483 = vunpack.c.h.b16 %v311
    %v484 = vunpack.c.l.b16 %v312
    %v485 = vunpack.c.h.b16 %v312
    %v486 = vunpack.c.l.b16 %v313
    %v487 = vunpack.c.h.b16 %v313
    %v488 = vunpack.c.l.b16 %v314
    %v489 = vunpack.c.h.b16 %v314
    %v490 = vunpack.c.l.b16 %v315
    %v491 = vunpack.c.h.b16 %v315
    %v492 = vunpack.c.l.b16 %v316
    %v493 = vunpack.c.h.b16 %v316
    %v494 = vunpack.c.l.b16 %v317
    %v495 = vunpack.c.h.b16 %v317
    %v496 = vunpack.c.l.b16 %v318
    %v497 = vunpack.c.h.b16 %v318
    %v498 = vunpack.c.l.b16 %v319
    %v499 = vunpack.c.h.b16 %v319
    %v500 = vunpack.c.l.b16 %v320
    %v501 = vunpack.c.h.b16 %v320
    %v502 = vpack.c.b16 %v454, %v438
    %v503 = vpack.c.b16 %v455, %v439
    %v504 = vpack.c.b16 %v456, %v440
    %v505 = vpack.c.b16 %v457, %v441
    %v506 = vpack.c.b16 %v458, %v442
    %v507 = vpack.c.b16 %v459, %v443
    %v508 = vpack.c.b16 %v460, %v444
    %v509 = vpack.c.b16 %v461, %v445
    %v510 = vpack.c.b16 %v462, %v446
    %v511 = vpack.c.b16 %v463, %v447
    %v512 = vpack.c.b16 %v464, %v448
    %v513 = vpack.c.b16 %v465, %v449
    %v514 = vpack.c.b16 %v466, %v450
    %v515 = vpack.c.b16 %v467, %v451
    %v516 = vpack.c.b16 %v468, %v452
    %v517 = vpack.c.b16 %v469, %v453
    %v518 = vpack.c.b16 %v486, %v470
    %v519 = vpack.c.b16 %v487, %v471
    %v520 = vpack.c.b16 %v488, %v472
    %v521 = vpack.c.b16 %v489, %v473
    %v522 = vpack.c.b16 %v490, %v474
    %v523 = vpack.c.b16 %v491, %v475
    %v524 = vpack.c.b16 %v492, %v476
    %v525 = vpack.c.b16 %v493, %v477
    %v526 = vpack.c.b16 %v494, %v478
    %v527 = vpack.c.b16 %v495, %v479
    %v528 = vpack.c.b16 %v496, %v480
    %v529 = vpack.c.b16 %v497, %v481
    %v530 = vpack.c.b16 %v498, %v482
    %v531 = vpack.c.b16 %v499, %v483
    %v532 = vpack.c.b16 %v500, %v484
    %v533 = vpack.c.b16 %v501, %v485
    %v567 = vsel %vm189, %v288, 0
    %569 = vmatprep.subr.bf16.mxu0 %v503
    %570 = vmatpush1.bf16.msra.mxu0 %v502
    %571 = vmatprep.subr.bf16.mxu0 %v519
    %572 = vmatpush1.bf16.msra.mxu0 %v518
    %573 = vmatprep.subr.bf16.mxu0 0
    %574 = vmatpush1.bf16.msra.mxu0 0
    %575 = vmatprep.subr.bf16.mxu0 0
    %576 = vmatpush1.bf16.msra.mxu0 0
    %577 = vmatprep.subr.bf16.mxu0 0
    %578 = vmatpush1.bf16.msra.mxu0 0
    %579 = vmatprep.subr.bf16.mxu0 0
    %580 = vmatpush1.bf16.msra.mxu0 0
    %581 = vmatprep.subr.bf16.mxu0 0
    %582 = vmatpush1.bf16.msra.mxu0 0
    %583 = vmatprep.subr.bf16.mxu0 0
    %584 = vmatpush1.bf16.msra.mxu0 0
    %585 = vmatprep.subr.bf16.mxu0 0
    %586 = vmatpush1.bf16.msra.mxu0 0
    %587 = vmatprep.subr.bf16.mxu0 0
    %588 = vmatpush1.bf16.msra.mxu0 0
    %589 = vmatprep.subr.bf16.mxu0 0
    %590 = vmatpush1.bf16.msra.mxu0 0
    %591 = vmatprep.subr.bf16.mxu0 0
    %592 = vmatpush1.bf16.msra.mxu0 0
    %593 = vmatprep.subr.bf16.mxu0 0
    %594 = vmatpush1.bf16.msra.mxu0 0
    %595 = vmatprep.subr.bf16.mxu0 0
    %596 = vmatpush1.bf16.msra.mxu0 0
    %597 = vmatprep.subr.bf16.mxu0 0
    %598 = vmatpush1.bf16.msra.mxu0 0
    %599 = vmatprep.subr.bf16.mxu0 0
    %600 = vmatpush1.bf16.msra.mxu0 0
    %601 = vmatprep.mubr.bf16.mxu0 0
    %602 = vmatmul.mubr.bf16.gmra.mrb[0].mxu0 %v567
    %v603 = vpop.f32.mrb[0].mxu0
    %v604 = vadd.f32 %v329, %v603
    %v605 = vpop.f32.mrb[0].mxu0
    %v606 = vadd.f32 %v333, %v605
    %v607 = vpop.f32.mrb[0].mxu0
    %v608 = vpop.f32.mrb[0].mxu0
    %609 = vdwg.mxu0
    %610 = vmatprep.subr.bf16.mxu0 %v505
    %611 = vmatpush1.bf16.msra.mxu0 %v504
    %612 = vmatprep.subr.bf16.mxu0 %v521
    %613 = vmatpush1.bf16.msra.mxu0 %v520
    %614 = vmatprep.subr.bf16.mxu0 0
    %615 = vmatpush1.bf16.msra.mxu0 0
    %616 = vmatprep.subr.bf16.mxu0 0
    %617 = vmatpush1.bf16.msra.mxu0 0
    %618 = vmatprep.subr.bf16.mxu0 0
    %619 = vmatpush1.bf16.msra.mxu0 0
    %620 = vmatprep.subr.bf16.mxu0 0
    %621 = vmatpush1.bf16.msra.mxu0 0
    %622 = vmatprep.subr.bf16.mxu0 0
    %623 = vmatpush1.bf16.msra.mxu0 0
    %624 = vmatprep.subr.bf16.mxu0 0
    %625 = vmatpush1.bf16.msra.mxu0 0
    %626 = vmatprep.subr.bf16.mxu0 0
    %627 = vmatpush1.bf16.msra.mxu0 0
    %628 = vmatprep.subr.bf16.mxu0 0
    %629 = vmatpush1.bf16.msra.mxu0 0
    %630 = vmatprep.subr.bf16.mxu0 0
    %631 = vmatpush1.bf16.msra.mxu0 0
    %632 = vmatprep.subr.bf16.mxu0 0
    %633 = vmatpush1.bf16.msra.mxu0 0
    %634 = vmatprep.subr.bf16.mxu0 0
    %635 = vmatpush1.bf16.msra.mxu0 0
    %636 = vmatprep.subr.bf16.mxu0 0
    %637 = vmatpush1.bf16.msra.mxu0 0
    %638 = vmatprep.subr.bf16.mxu0 0
    %639 = vmatpush1.bf16.msra.mxu0 0
    %640 = vmatprep.subr.bf16.mxu0 0
    %641 = vmatpush1.bf16.msra.mxu0 0
    %642 = vmatprep.mubr.bf16.mxu0 0
    %643 = vmatmul.mubr.bf16.gmra.mrb[0].mxu0 %v567
    %v644 = vpop.f32.mrb[0].mxu0
    %v645 = vadd.f32 %v337, %v644
    %v646 = vpop.f32.mrb[0].mxu0
    %v647 = vadd.f32 %v341, %v646
    %v648 = vpop.f32.mrb[0].mxu0
    %v649 = vpop.f32.mrb[0].mxu0
    %650 = vdwg.mxu0
    %651 = vmatprep.subr.bf16.mxu0 %v507
    %652 = vmatpush1.bf16.msra.mxu0 %v506
    %653 = vmatprep.subr.bf16.mxu0 %v523
    %654 = vmatpush1.bf16.msra.mxu0 %v522
    %655 = vmatprep.subr.bf16.mxu0 0
    %656 = vmatpush1.bf16.msra.mxu0 0
    %657 = vmatprep.subr.bf16.mxu0 0
    %658 = vmatpush1.bf16.msra.mxu0 0
    %659 = vmatprep.subr.bf16.mxu0 0
    %660 = vmatpush1.bf16.msra.mxu0 0
    %661 = vmatprep.subr.bf16.mxu0 0
    %662 = vmatpush1.bf16.msra.mxu0 0
    %663 = vmatprep.subr.bf16.mxu0 0
    %664 = vmatpush1.bf16.msra.mxu0 0
    %665 = vmatprep.subr.bf16.mxu0 0
    %666 = vmatpush1.bf16.msra.mxu0 0
    %667 = vmatprep.subr.bf16.mxu0 0
    %668 = vmatpush1.bf16.msra.mxu0 0
    %669 = vmatprep.subr.bf16.mxu0 0
    %670 = vmatpush1.bf16.msra.mxu0 0
    %671 = vmatprep.subr.bf16.mxu0 0
    %672 = vmatpush1.bf16.msra.mxu0 0
    %673 = vmatprep.subr.bf16.mxu0 0
    %674 = vmatpush1.bf16.msra.mxu0 0
    %675 = vmatprep.subr.bf16.mxu0 0
    %676 = vmatpush1.bf16.msra.mxu0 0
    %677 = vmatprep.subr.bf16.mxu0 0
    %678 = vmatpush1.bf16.msra.mxu0 0
    %679 = vmatprep.subr.bf16.mxu0 0
    %680 = vmatpush1.bf16.msra.mxu0 0
    %681 = vmatprep.subr.bf16.mxu0 0
    %682 = vmatpush1.bf16.msra.mxu0 0
    %683 = vmatprep.mubr.bf16.mxu0 0
    %684 = vmatmul.mubr.bf16.gmra.mrb[0].mxu0 %v567
    %v685 = vpop.f32.mrb[0].mxu0
    %v686 = vadd.f32 %v345, %v685
    %v687 = vpop.f32.mrb[0].mxu0
    %v688 = vadd.f32 %v349, %v687
    %v689 = vpop.f32.mrb[0].mxu0
    %v690 = vpop.f32.mrb[0].mxu0
    %691 = vdwg.mxu0
    %692 = vmatprep.subr.bf16.mxu0 %v509
    %693 = vmatpush1.bf16.msra.mxu0 %v508
    %694 = vmatprep.subr.bf16.mxu0 %v525
    %695 = vmatpush1.bf16.msra.mxu0 %v524
    %696 = vmatprep.subr.bf16.mxu0 0
    %697 = vmatpush1.bf16.msra.mxu0 0
    %698 = vmatprep.subr.bf16.mxu0 0
    %699 = vmatpush1.bf16.msra.mxu0 0
    %700 = vmatprep.subr.bf16.mxu0 0
    %701 = vmatpush1.bf16.msra.mxu0 0
    %702 = vmatprep.subr.bf16.mxu0 0
    %703 = vmatpush1.bf16.msra.mxu0 0
    %704 = vmatprep.subr.bf16.mxu0 0
    %705 = vmatpush1.bf16.msra.mxu0 0
    %706 = vmatprep.subr.bf16.mxu0 0
    %707 = vmatpush1.bf16.msra.mxu0 0
    %708 = vmatprep.subr.bf16.mxu0 0
    %709 = vmatpush1.bf16.msra.mxu0 0
    %710 = vmatprep.subr.bf16.mxu0 0
    %711 = vmatpush1.bf16.msra.mxu0 0
    %712 = vmatprep.subr.bf16.mxu0 0
    %713 = vmatpush1.bf16.msra.mxu0 0
    %714 = vmatprep.subr.bf16.mxu0 0
    %715 = vmatpush1.bf16.msra.mxu0 0
    %716 = vmatprep.subr.bf16.mxu0 0
    %717 = vmatpush1.bf16.msra.mxu0 0
    %718 = vmatprep.subr.bf16.mxu0 0
    %719 = vmatpush1.bf16.msra.mxu0 0
    %720 = vmatprep.subr.bf16.mxu0 0
    %721 = vmatpush1.bf16.msra.mxu0 0
    %722 = vmatprep.subr.bf16.mxu0 0
    %723 = vmatpush1.bf16.msra.mxu0 0
    %724 = vmatprep.mubr.bf16.mxu0 0
    %725 = vmatmul.mubr.bf16.gmra.mrb[0].mxu0 %v567
    %v726 = vpop.f32.mrb[0].mxu0
    %v727 = vadd.f32 %v353, %v726
    %v728 = vpop.f32.mrb[0].mxu0
    %v729 = vadd.f32 %v357, %v728
    %v730 = vpop.f32.mrb[0].mxu0
    %v731 = vpop.f32.mrb[0].mxu0
    %732 = vdwg.mxu0
    %733 = vmatprep.subr.bf16.mxu0 %v511
    %734 = vmatpush1.bf16.msra.mxu0 %v510
    %735 = vmatprep.subr.bf16.mxu0 %v527
    %736 = vmatpush1.bf16.msra.mxu0 %v526
    %737 = vmatprep.subr.bf16.mxu0 0
    %738 = vmatpush1.bf16.msra.mxu0 0
    %739 = vmatprep.subr.bf16.mxu0 0
    %740 = vmatpush1.bf16.msra.mxu0 0
    %741 = vmatprep.subr.bf16.mxu0 0
    %742 = vmatpush1.bf16.msra.mxu0 0
    %743 = vmatprep.subr.bf16.mxu0 0
    %744 = vmatpush1.bf16.msra.mxu0 0
    %745 = vmatprep.subr.bf16.mxu0 0
    %746 = vmatpush1.bf16.msra.mxu0 0
    %747 = vmatprep.subr.bf16.mxu0 0
    %748 = vmatpush1.bf16.msra.mxu0 0
    %749 = vmatprep.subr.bf16.mxu0 0
    %750 = vmatpush1.bf16.msra.mxu0 0
    %751 = vmatprep.subr.bf16.mxu0 0
    %752 = vmatpush1.bf16.msra.mxu0 0
    %753 = vmatprep.subr.bf16.mxu0 0
    %754 = vmatpush1.bf16.msra.mxu0 0
    %755 = vmatprep.subr.bf16.mxu0 0
    %756 = vmatpush1.bf16.msra.mxu0 0
    %757 = vmatprep.subr.bf16.mxu0 0
    %758 = vmatpush1.bf16.msra.mxu0 0
    %759 = vmatprep.subr.bf16.mxu0 0
    %760 = vmatpush1.bf16.msra.mxu0 0
    %761 = vmatprep.subr.bf16.mxu0 0
    %762 = vmatpush1.bf16.msra.mxu0 0
    %763 = vmatprep.subr.bf16.mxu0 0
    %764 = vmatpush1.bf16.msra.mxu0 0
    %765 = vmatprep.mubr.bf16.mxu0 0
    %766 = vmatmul.mubr.bf16.gmra.mrb[0].mxu0 %v567
    %v767 = vpop.f32.mrb[0].mxu0
    %v768 = vadd.f32 %v361, %v767
    %v769 = vpop.f32.mrb[0].mxu0
    %v770 = vadd.f32 %v365, %v769
    %v771 = vpop.f32.mrb[0].mxu0
    %v772 = vpop.f32.mrb[0].mxu0
    %773 = vdwg.mxu0
    %774 = vmatprep.subr.bf16.mxu0 %v513
    %775 = vmatpush1.bf16.msra.mxu0 %v512
    %776 = vmatprep.subr.bf16.mxu0 %v529
    %777 = vmatpush1.bf16.msra.mxu0 %v528
    %778 = vmatprep.subr.bf16.mxu0 0
    %779 = vmatpush1.bf16.msra.mxu0 0
    %780 = vmatprep.subr.bf16.mxu0 0
    %781 = vmatpush1.bf16.msra.mxu0 0
    %782 = vmatprep.subr.bf16.mxu0 0
    %783 = vmatpush1.bf16.msra.mxu0 0
    %784 = vmatprep.subr.bf16.mxu0 0
    %785 = vmatpush1.bf16.msra.mxu0 0
    %786 = vmatprep.subr.bf16.mxu0 0
    %787 = vmatpush1.bf16.msra.mxu0 0
    %788 = vmatprep.subr.bf16.mxu0 0
    %789 = vmatpush1.bf16.msra.mxu0 0
    %790 = vmatprep.subr.bf16.mxu0 0
    %791 = vmatpush1.bf16.msra.mxu0 0
    %792 = vmatprep.subr.bf16.mxu0 0
    %793 = vmatpush1.bf16.msra.mxu0 0
    %794 = vmatprep.subr.bf16.mxu0 0
    %795 = vmatpush1.bf16.msra.mxu0 0
    %796 = vmatprep.subr.bf16.mxu0 0
    %797 = vmatpush1.bf16.msra.mxu0 0
    %798 = vmatprep.subr.bf16.mxu0 0
    %799 = vmatpush1.bf16.msra.mxu0 0
    %800 = vmatprep.subr.bf16.mxu0 0
    %801 = vmatpush1.bf16.msra.mxu0 0
    %802 = vmatprep.subr.bf16.mxu0 0
    %803 = vmatpush1.bf16.msra.mxu0 0
    %804 = vmatprep.subr.bf16.mxu0 0
    %805 = vmatpush1.bf16.msra.mxu0 0
    %806 = vmatprep.mubr.bf16.mxu0 0
    %807 = vmatmul.mubr.bf16.gmra.mrb[0].mxu0 %v567
    %v808 = vpop.f32.mrb[0].mxu0
    %v809 = vadd.f32 %v369, %v808
    %v810 = vpop.f32.mrb[0].mxu0
    %v811 = vadd.f32 %v373, %v810
    %v812 = vpop.f32.mrb[0].mxu0
    %v813 = vpop.f32.mrb[0].mxu0
    %814 = vdwg.mxu0
    %815 = vmatprep.subr.bf16.mxu0 %v515
    %816 = vmatpush1.bf16.msra.mxu0 %v514
    %817 = vmatprep.subr.bf16.mxu0 %v531
    %818 = vmatpush1.bf16.msra.mxu0 %v530
    %819 = vmatprep.subr.bf16.mxu0 0
    %820 = vmatpush1.bf16.msra.mxu0 0
    %821 = vmatprep.subr.bf16.mxu0 0
    %822 = vmatpush1.bf16.msra.mxu0 0
    %823 = vmatprep.subr.bf16.mxu0 0
    %824 = vmatpush1.bf16.msra.mxu0 0
    %825 = vmatprep.subr.bf16.mxu0 0
    %826 = vmatpush1.bf16.msra.mxu0 0
    %827 = vmatprep.subr.bf16.mxu0 0
    %828 = vmatpush1.bf16.msra.mxu0 0
    %829 = vmatprep.subr.bf16.mxu0 0
    %830 = vmatpush1.bf16.msra.mxu0 0
    %831 = vmatprep.subr.bf16.mxu0 0
    %832 = vmatpush1.bf16.msra.mxu0 0
    %833 = vmatprep.subr.bf16.mxu0 0
    %834 = vmatpush1.bf16.msra.mxu0 0
    %835 = vmatprep.subr.bf16.mxu0 0
    %836 = vmatpush1.bf16.msra.mxu0 0
    %837 = vmatprep.subr.bf16.mxu0 0
    %838 = vmatpush1.bf16.msra.mxu0 0
    %839 = vmatprep.subr.bf16.mxu0 0
    %840 = vmatpush1.bf16.msra.mxu0 0
    %841 = vmatprep.subr.bf16.mxu0 0
    %842 = vmatpush1.bf16.msra.mxu0 0
    %843 = vmatprep.subr.bf16.mxu0 0
    %844 = vmatpush1.bf16.msra.mxu0 0
    %845 = vmatprep.subr.bf16.mxu0 0
    %846 = vmatpush1.bf16.msra.mxu0 0
    %847 = vmatprep.mubr.bf16.mxu0 0
    %848 = vmatmul.mubr.bf16.gmra.mrb[0].mxu0 %v567
    %v849 = vpop.f32.mrb[0].mxu0
    %v850 = vadd.f32 %v377, %v849
    %v851 = vpop.f32.mrb[0].mxu0
    %v852 = vadd.f32 %v381, %v851
    %v853 = vpop.f32.mrb[0].mxu0
    %v854 = vpop.f32.mrb[0].mxu0
    %855 = vdwg.mxu0
    %856 = vmatprep.subr.bf16.mxu0 %v517
    %857 = vmatpush1.bf16.msra.mxu0 %v516
    %858 = vmatprep.subr.bf16.mxu0 %v533
    %859 = vmatpush1.bf16.msra.mxu0 %v532
    %860 = vmatprep.subr.bf16.mxu0 0
    %861 = vmatpush1.bf16.msra.mxu0 0
    %862 = vmatprep.subr.bf16.mxu0 0
    %863 = vmatpush1.bf16.msra.mxu0 0
    %864 = vmatprep.subr.bf16.mxu0 0
    %865 = vmatpush1.bf16.msra.mxu0 0
    %866 = vmatprep.subr.bf16.mxu0 0
    %867 = vmatpush1.bf16.msra.mxu0 0
    %868 = vmatprep.subr.bf16.mxu0 0
    %869 = vmatpush1.bf16.msra.mxu0 0
    %870 = vmatprep.subr.bf16.mxu0 0
    %871 = vmatpush1.bf16.msra.mxu0 0
    %872 = vmatprep.subr.bf16.mxu0 0
    %873 = vmatpush1.bf16.msra.mxu0 0
    %874 = vmatprep.subr.bf16.mxu0 0
    %875 = vmatpush1.bf16.msra.mxu0 0
    %876 = vmatprep.subr.bf16.mxu0 0
    %877 = vmatpush1.bf16.msra.mxu0 0
    %878 = vmatprep.subr.bf16.mxu0 0
    %879 = vmatpush1.bf16.msra.mxu0 0
    %880 = vmatprep.subr.bf16.mxu0 0
    %881 = vmatpush1.bf16.msra.mxu0 0
    %882 = vmatprep.subr.bf16.mxu0 0
    %883 = vmatpush1.bf16.msra.mxu0 0
    %884 = vmatprep.subr.bf16.mxu0 0
    %885 = vmatpush1.bf16.msra.mxu0 0
    %886 = vmatprep.subr.bf16.mxu0 0
    %887 = vmatpush1.bf16.msra.mxu0 0
    %888 = vmatprep.mubr.bf16.mxu0 0
    %889 = vmatmul.mubr.bf16.gmra.mrb[0].mxu0 %v567
    %v890 = vpop.f32.mrb[0].mxu0
    %v891 = vadd.f32 %v385, %v890
    %v892 = vpop.f32.mrb[0].mxu0
    %v893 = vadd.f32 %v389, %v892
    %v894 = vpop.f32.mrb[0].mxu0
    %v895 = vpop.f32.mrb[0].mxu0
    %896 = vdwg.mxu0
    %v897 = vmax.f32 %v604, 0.0
    %v898 = vmax.f32 %v606, 0.0
    %v899 = vmax.f32 %v645, 0.0
    %v900 = vmax.f32 %v647, 0.0
    %v901 = vmax.f32 %v686, 0.0
    %v902 = vmax.f32 %v688, 0.0
    %v903 = vmax.f32 %v727, 0.0
    %v904 = vmax.f32 %v729, 0.0
    %v905 = vmax.f32 %v768, 0.0
    %v906 = vmax.f32 %v770, 0.0
    %v907 = vmax.f32 %v809, 0.0
    %v908 = vmax.f32 %v811, 0.0
    %v909 = vmax.f32 %v850, 0.0
    %v910 = vmax.f32 %v852, 0.0
    %v911 = vmax.f32 %v891, 0.0
    %v912 = vmax.f32 %v893, 0.0
    %v913 = vpack.c.bf16 %v897, %v897
    %v914 = vpack.c.bf16 %v898, %v898
    %v915 = vpack.c.bf16 %v899, %v899
    %v916 = vpack.c.bf16 %v900, %v900
    %v917 = vpack.c.bf16 %v901, %v901
    %v918 = vpack.c.bf16 %v902, %v902
    %v919 = vpack.c.bf16 %v903, %v903
    %v920 = vpack.c.bf16 %v904, %v904
    %v921 = vpack.c.bf16 %v905, %v905
    %v922 = vpack.c.bf16 %v906, %v906
    %v923 = vpack.c.bf16 %v907, %v907
    %v924 = vpack.c.bf16 %v908, %v908
    %v925 = vpack.c.bf16 %v909, %v909
    %v926 = vpack.c.bf16 %v910, %v910
    %v927 = vpack.c.bf16 %v911, %v911
    %v928 = vpack.c.bf16 %v912, %v912
    %v929 = vld [vmem:[#allocation10] sm:$0xff]
    %v930 = vld [vmem:[#allocation10 + $0x8] sm:$0xff]
    %v931 = vld [vmem:[#allocation10 + $0x10] sm:$0xff]
    %v932 = vld [vmem:[#allocation10 + $0x18] sm:$0xff]
    %v933 = vld [vmem:[#allocation10 + $0x20] sm:$0xff]
    %v934 = vld [vmem:[#allocation10 + $0x28] sm:$0xff]
    %v935 = vld [vmem:[#allocation10 + $0x30] sm:$0xff]
    %v936 = vld [vmem:[#allocation10 + $0x38] sm:$0xff]
    %v937 = vld [vmem:[#allocation10 + $0x40] sm:$0xff]
    %v938 = vld [vmem:[#allocation10 + $0x48] sm:$0xff]
    %v939 = vld [vmem:[#allocation10 + $0x50] sm:$0xff]
    %v940 = vld [vmem:[#allocation10 + $0x58] sm:$0xff]
    %v941 = vld [vmem:[#allocation10 + $0x60] sm:$0xff]
    %v942 = vld [vmem:[#allocation10 + $0x68] sm:$0xff]
    %v943 = vld [vmem:[#allocation10 + $0x70] sm:$0xff]
    %v944 = vld [vmem:[#allocation10 + $0x78] sm:$0xff]
    %v945 = vld [vmem:[#allocation10 + $0x80] sm:$0xff]
    %v946 = vld [vmem:[#allocation10 + $0x88] sm:$0xff]
    %v947 = vld [vmem:[#allocation10 + $0x90] sm:$0xff]
    %v948 = vld [vmem:[#allocation10 + $0x98] sm:$0xff]
    %v949 = vld [vmem:[#allocation10 + $0xa0] sm:$0xff]
    %v950 = vld [vmem:[#allocation10 + $0xa8] sm:$0xff]
    %v951 = vld [vmem:[#allocation10 + $0xb0] sm:$0xff]
    %v952 = vld [vmem:[#allocation10 + $0xb8] sm:$0xff]
    %v953 = vld [vmem:[#allocation10 + $0xc0] sm:$0xff]
    %v954 = vld [vmem:[#allocation10 + $0xc8] sm:$0xff]
    %v955 = vld [vmem:[#allocation10 + $0xd0] sm:$0xff]
    %v956 = vld [vmem:[#allocation10 + $0xd8] sm:$0xff]
    %v957 = vld [vmem:[#allocation10 + $0xe0] sm:$0xff]
    %v958 = vld [vmem:[#allocation10 + $0xe8] sm:$0xff]
    %v959 = vld [vmem:[#allocation10 + $0xf0] sm:$0xff]
    %v960 = vld [vmem:[#allocation10 + $0xf8] sm:$0xff]
    %v961 = vlaneseq
    %v962 = vshrl.u32 %v961, 7
    %v963 = vsub.s32 1, %v962
    %v964 = vrot.slane %v98, %v963
    %v997 = vunpack.c.l.b16 %v929
    %v998 = vunpack.c.h.b16 %v929
    %v999 = vunpack.c.l.b16 %v930
    %v1000 = vunpack.c.h.b16 %v930
    %v1001 = vunpack.c.l.b16 %v931
    %v1002 = vunpack.c.h.b16 %v931
    %v1003 = vunpack.c.l.b16 %v932
    %v1004 = vunpack.c.h.b16 %v932
    %v1005 = vunpack.c.l.b16 %v933
    %v1006 = vunpack.c.h.b16 %v933
    %v1007 = vunpack.c.l.b16 %v934
    %v1008 = vunpack.c.h.b16 %v934
    %v1009 = vunpack.c.l.b16 %v935
    %v1010 = vunpack.c.h.b16 %v935
    %v1011 = vunpack.c.l.b16 %v936
    %v1012 = vunpack.c.h.b16 %v936
    %v1013 = vunpack.c.l.b16 %v937
    %v1014 = vunpack.c.h.b16 %v937
    %v1015 = vunpack.c.l.b16 %v938
    %v1016 = vunpack.c.h.b16 %v938
    %v1017 = vunpack.c.l.b16 %v939
    %v1018 = vunpack.c.h.b16 %v939
    %v1019 = vunpack.c.l.b16 %v940
    %v1020 = vunpack.c.h.b16 %v940
    %v1021 = vunpack.c.l.b16 %v941
    %v1022 = vunpack.c.h.b16 %v941
    %v1023 = vunpack.c.l.b16 %v942
    %v1024 = vunpack.c.h.b16 %v942
    %v1025 = vunpack.c.l.b16 %v943
    %v1026 = vunpack.c.h.b16 %v943
    %v1027 = vunpack.c.l.b16 %v944
    %v1028 = vunpack.c.h.b16 %v944
    %v1029 = vunpack.c.l.b16 %v945
    %v1030 = vunpack.c.h.b16 %v945
    %v1031 = vunpack.c.l.b16 %v946
    %v1032 = vunpack.c.h.b16 %v946
    %v1033 = vunpack.c.l.b16 %v947
    %v1034 = vunpack.c.h.b16 %v947
    %v1035 = vunpack.c.l.b16 %v948
    %v1036 = vunpack.c.h.b16 %v948
    %v1037 = vunpack.c.l.b16 %v949
    %v1038 = vunpack.c.h.b16 %v949
    %v1039 = vunpack.c.l.b16 %v950
    %v1040 = vunpack.c.h.b16 %v950
    %v1041 = vunpack.c.l.b16 %v951
    %v1042 = vunpack.c.h.b16 %v951
    %v1043 = vunpack.c.l.b16 %v952
    %v1044 = vunpack.c.h.b16 %v952
    %v1045 = vunpack.c.l.b16 %v953
    %v1046 = vunpack.c.h.b16 %v953
    %v1047 = vunpack.c.l.b16 %v954
    %v1048 = vunpack.c.h.b16 %v954
    %v1049 = vunpack.c.l.b16 %v955
    %v1050 = vunpack.c.h.b16 %v955
    %v1051 = vunpack.c.l.b16 %v956
    %v1052 = vunpack.c.h.b16 %v956
    %v1053 = vunpack.c.l.b16 %v957
    %v1054 = vunpack.c.h.b16 %v957
    %v1055 = vunpack.c.l.b16 %v958
    %v1056 = vunpack.c.h.b16 %v958
    %v1057 = vunpack.c.l.b16 %v959
    %v1058 = vunpack.c.h.b16 %v959
    %v1059 = vunpack.c.l.b16 %v960
    %v1060 = vunpack.c.h.b16 %v960
    %v1061 = vpack.c.b16 %v1013, %v997
    %v1062 = vpack.c.b16 %v1014, %v998
    %v1063 = vpack.c.b16 %v1015, %v999
    %v1064 = vpack.c.b16 %v1016, %v1000
    %v1065 = vpack.c.b16 %v1017, %v1001
    %v1066 = vpack.c.b16 %v1018, %v1002
    %v1067 = vpack.c.b16 %v1019, %v1003
    %v1068 = vpack.c.b16 %v1020, %v1004
    %v1069 = vpack.c.b16 %v1021, %v1005
    %v1070 = vpack.c.b16 %v1022, %v1006
    %v1071 = vpack.c.b16 %v1023, %v1007
    %v1072 = vpack.c.b16 %v1024, %v1008
    %v1073 = vpack.c.b16 %v1025, %v1009
    %v1074 = vpack.c.b16 %v1026, %v1010
    %v1075 = vpack.c.b16 %v1027, %v1011
    %v1076 = vpack.c.b16 %v1028, %v1012
    %v1077 = vpack.c.b16 %v1045, %v1029
    %v1078 = vpack.c.b16 %v1046, %v1030
    %v1079 = vpack.c.b16 %v1047, %v1031
    %v1080 = vpack.c.b16 %v1048, %v1032
    %v1081 = vpack.c.b16 %v1049, %v1033
    %v1082 = vpack.c.b16 %v1050, %v1034
    %v1083 = vpack.c.b16 %v1051, %v1035
    %v1084 = vpack.c.b16 %v1052, %v1036
    %v1085 = vpack.c.b16 %v1053, %v1037
    %v1086 = vpack.c.b16 %v1054, %v1038
    %v1087 = vpack.c.b16 %v1055, %v1039
    %v1088 = vpack.c.b16 %v1056, %v1040
    %v1089 = vpack.c.b16 %v1057, %v1041
    %v1090 = vpack.c.b16 %v1058, %v1042
    %v1091 = vpack.c.b16 %v1059, %v1043
    %v1092 = vpack.c.b16 %v1060, %v1044
    %1125 = vmatprep.subr.bf16.mxu0 %v1062
    %1126 = vmatpush1.bf16.xpose.msra.mxu0 %v1061
    %1127 = vmatprep.subr.bf16.mxu0 %v1078
    %1128 = vmatpush1.bf16.xpose.msra.mxu0 %v1077
    %1129 = vmatprep.subr.bf16.mxu0 0
    %1130 = vmatpush1.bf16.xpose.msra.mxu0 0
    %1131 = vmatprep.subr.bf16.mxu0 0
    %1132 = vmatpush1.bf16.xpose.msra.mxu0 0
    %1133 = vmatprep.subr.bf16.mxu0 0
    %1134 = vmatpush1.bf16.xpose.msra.mxu0 0
    %1135 = vmatprep.subr.bf16.mxu0 0
    %1136 = vmatpush1.bf16.xpose.msra.mxu0 0
    %1137 = vmatprep.subr.bf16.mxu0 0
    %1138 = vmatpush1.bf16.xpose.msra.mxu0 0
    %1139 = vmatprep.subr.bf16.mxu0 0
    %1140 = vmatpush1.bf16.xpose.msra.mxu0 0
    %1141 = vmatprep.subr.bf16.mxu0 0
    %1142 = vmatpush1.bf16.xpose.msra.mxu0 0
    %1143 = vmatprep.subr.bf16.mxu0 0
    %1144 = vmatpush1.bf16.xpose.msra.mxu0 0
    %1145 = vmatprep.subr.bf16.mxu0 0
    %1146 = vmatpush1.bf16.xpose.msra.mxu0 0
    %1147 = vmatprep.subr.bf16.mxu0 0
    %1148 = vmatpush1.bf16.xpose.msra.mxu0 0
    %1149 = vmatprep.subr.bf16.mxu0 0
    %1150 = vmatpush1.bf16.xpose.msra.mxu0 0
    %1151 = vmatprep.subr.bf16.mxu0 0
    %1152 = vmatpush1.bf16.xpose.msra.mxu0 0
    %1153 = vmatprep.subr.bf16.mxu0 0
    %1154 = vmatpush1.bf16.xpose.msra.mxu0 0
    %1155 = vmatprep.subr.bf16.mxu0 0
    %1156 = vmatpush1.bf16.xpose.msra.mxu0 0
    %1157 = vmatprep.mubr.bf16.mxu0 %v914
    %1158 = vmatmul.mubr.bf16.gmra.mrb[0].mxu0 %v913
    %v1159 = vpop.f32.mrb[0].mxu0
    %v1160 = vadd.f32 %v964, %v1159
    %v1161 = vpop.f32.mrb[0].mxu0
    %v1162 = vpop.f32.mrb[0].mxu0
    %v1163 = vpop.f32.mrb[0].mxu0
    %1164 = vdwg.mxu0
    %1165 = vmatprep.subr.bf16.mxu0 %v1064
    %1166 = vmatpush1.bf16.xpose.msra.mxu0 %v1063
    %1167 = vmatprep.subr.bf16.mxu0 %v1080
    %1168 = vmatpush1.bf16.xpose.msra.mxu0 %v1079
    %1169 = vmatprep.subr.bf16.mxu0 0
    %1170 = vmatpush1.bf16.xpose.msra.mxu0 0
    %1171 = vmatprep.subr.bf16.mxu0 0
    %1172 = vmatpush1.bf16.xpose.msra.mxu0 0
    %1173 = vmatprep.subr.bf16.mxu0 0
    %1174 = vmatpush1.bf16.xpose.msra.mxu0 0
    %1175 = vmatprep.subr.bf16.mxu0 0
    %1176 = vmatpush1.bf16.xpose.msra.mxu0 0
    %1177 = vmatprep.subr.bf16.mxu0 0
    %1178 = vmatpush1.bf16.xpose.msra.mxu0 0
    %1179 = vmatprep.subr.bf16.mxu0 0
    %1180 = vmatpush1.bf16.xpose.msra.mxu0 0
    %1181 = vmatprep.subr.bf16.mxu0 0
    %1182 = vmatpush1.bf16.xpose.msra.mxu0 0
    %1183 = vmatprep.subr.bf16.mxu0 0
    %1184 = vmatpush1.bf16.xpose.msra.mxu0 0
    %1185 = vmatprep.subr.bf16.mxu0 0
    %1186 = vmatpush1.bf16.xpose.msra.mxu0 0
    %1187 = vmatprep.subr.bf16.mxu0 0
    %1188 = vmatpush1.bf16.xpose.msra.mxu0 0
    %1189 = vmatprep.subr.bf16.mxu0 0
    %1190 = vmatpush1.bf16.xpose.msra.mxu0 0
    %1191 = vmatprep.subr.bf16.mxu0 0
    %1192 = vmatpush1.bf16.xpose.msra.mxu0 0
    %1193 = vmatprep.subr.bf16.mxu0 0
    %1194 = vmatpush1.bf16.xpose.msra.mxu0 0
    %1195 = vmatprep.subr.bf16.mxu0 0
    %1196 = vmatpush1.bf16.xpose.msra.mxu0 0
    %1197 = vmatprep.mubr.bf16.mxu0 %v916
    %1198 = vmatmul.mubr.bf16.gmra.mrb[0].mxu0 %v915
    %v1199 = vpop.f32.mrb[0].mxu0
    %v1200 = vadd.f32 %v1160, %v1199
    %v1201 = vpop.f32.mrb[0].mxu0
    %v1202 = vpop.f32.mrb[0].mxu0
    %v1203 = vpop.f32.mrb[0].mxu0
    %1204 = vdwg.mxu0
    %1205 = vmatprep.subr.bf16.mxu0 %v1066
    %1206 = vmatpush1.bf16.xpose.msra.mxu0 %v1065
    %1207 = vmatprep.subr.bf16.mxu0 %v1082
    %1208 = vmatpush1.bf16.xpose.msra.mxu0 %v1081
    %1209 = vmatprep.subr.bf16.mxu0 0
    %1210 = vmatpush1.bf16.xpose.msra.mxu0 0
    %1211 = vmatprep.subr.bf16.mxu0 0
    %1212 = vmatpush1.bf16.xpose.msra.mxu0 0
    %1213 = vmatprep.subr.bf16.mxu0 0
    %1214 = vmatpush1.bf16.xpose.msra.mxu0 0
    %1215 = vmatprep.subr.bf16.mxu0 0
    %1216 = vmatpush1.bf16.xpose.msra.mxu0 0
    %1217 = vmatprep.subr.bf16.mxu0 0
    %1218 = vmatpush1.bf16.xpose.msra.mxu0 0
    %1219 = vmatprep.subr.bf16.mxu0 0
    %1220 = vmatpush1.bf16.xpose.msra.mxu0 0
    %1221 = vmatprep.subr.bf16.mxu0 0
    %1222 = vmatpush1.bf16.xpose.msra.mxu0 0
    %1223 = vmatprep.subr.bf16.mxu0 0
    %1224 = vmatpush1.bf16.xpose.msra.mxu0 0
    %1225 = vmatprep.subr.bf16.mxu0 0
    %1226 = vmatpush1.bf16.xpose.msra.mxu0 0
    %1227 = vmatprep.subr.bf16.mxu0 0
    %1228 = vmatpush1.bf16.xpose.msra.mxu0 0
    %1229 = vmatprep.subr.bf16.mxu0 0
    %1230 = vmatpush1.bf16.xpose.msra.mxu0 0
    %1231 = vmatprep.subr.bf16.mxu0 0
    %1232 = vmatpush1.bf16.xpose.msra.mxu0 0
    %1233 = vmatprep.subr.bf16.mxu0 0
    %1234 = vmatpush1.bf16.xpose.msra.mxu0 0
    %1235 = vmatprep.subr.bf16.mxu0 0
    %1236 = vmatpush1.bf16.xpose.msra.mxu0 0
    %1237 = vmatprep.mubr.bf16.mxu0 %v918
    %1238 = vmatmul.mubr.bf16.gmra.mrb[0].mxu0 %v917
    %v1239 = vpop.f32.mrb[0].mxu0
    %v1240 = vadd.f32 %v1200, %v1239
    %v1241 = vpop.f32.mrb[0].mxu0
    %v1242 = vpop.f32.mrb[0].mxu0
    %v1243 = vpop.f32.mrb[0].mxu0
    %1244 = vdwg.mxu0
    %1245 = vmatprep.subr.bf16.mxu0 %v1068
    %1246 = vmatpush1.bf16.xpose.msra.mxu0 %v1067
    %1247 = vmatprep.subr.bf16.mxu0 %v1084
    %1248 = vmatpush1.bf16.xpose.msra.mxu0 %v1083
    %1249 = vmatprep.subr.bf16.mxu0 0
    %1250 = vmatpush1.bf16.xpose.msra.mxu0 0
    %1251 = vmatprep.subr.bf16.mxu0 0
    %1252 = vmatpush1.bf16.xpose.msra.mxu0 0
    %1253 = vmatprep.subr.bf16.mxu0 0
    %1254 = vmatpush1.bf16.xpose.msra.mxu0 0
    %1255 = vmatprep.subr.bf16.mxu0 0
    %1256 = vmatpush1.bf16.xpose.msra.mxu0 0
    %1257 = vmatprep.subr.bf16.mxu0 0
    %1258 = vmatpush1.bf16.xpose.msra.mxu0 0
    %1259 = vmatprep.subr.bf16.mxu0 0
    %1260 = vmatpush1.bf16.xpose.msra.mxu0 0
    %1261 = vmatprep.subr.bf16.mxu0 0
    %1262 = vmatpush1.bf16.xpose.msra.mxu0 0
    %1263 = vmatprep.subr.bf16.mxu0 0
    %1264 = vmatpush1.bf16.xpose.msra.mxu0 0
    %1265 = vmatprep.subr.bf16.mxu0 0
    %1266 = vmatpush1.bf16.xpose.msra.mxu0 0
    %1267 = vmatprep.subr.bf16.mxu0 0
    %1268 = vmatpush1.bf16.xpose.msra.mxu0 0
    %1269 = vmatprep.subr.bf16.mxu0 0
    %1270 = vmatpush1.bf16.xpose.msra.mxu0 0
    %1271 = vmatprep.subr.bf16.mxu0 0
    %1272 = vmatpush1.bf16.xpose.msra.mxu0 0
    %1273 = vmatprep.subr.bf16.mxu0 0
    %1274 = vmatpush1.bf16.xpose.msra.mxu0 0
    %1275 = vmatprep.subr.bf16.mxu0 0
    %1276 = vmatpush1.bf16.xpose.msra.mxu0 0
    %1277 = vmatprep.mubr.bf16.mxu0 %v920
    %1278 = vmatmul.mubr.bf16.gmra.mrb[0].mxu0 %v919
    %v1279 = vpop.f32.mrb[0].mxu0
    %v1280 = vadd.f32 %v1240, %v1279
    %v1281 = vpop.f32.mrb[0].mxu0
    %v1282 = vpop.f32.mrb[0].mxu0
    %v1283 = vpop.f32.mrb[0].mxu0
    %1284 = vdwg.mxu0
    %1285 = vmatprep.subr.bf16.mxu0 %v1070
    %1286 = vmatpush1.bf16.xpose.msra.mxu0 %v1069
    %1287 = vmatprep.subr.bf16.mxu0 %v1086
    %1288 = vmatpush1.bf16.xpose.msra.mxu0 %v1085
    %1289 = vmatprep.subr.bf16.mxu0 0
    %1290 = vmatpush1.bf16.xpose.msra.mxu0 0
    %1291 = vmatprep.subr.bf16.mxu0 0
    %1292 = vmatpush1.bf16.xpose.msra.mxu0 0
    %1293 = vmatprep.subr.bf16.mxu0 0
    %1294 = vmatpush1.bf16.xpose.msra.mxu0 0
    %1295 = vmatprep.subr.bf16.mxu0 0
    %1296 = vmatpush1.bf16.xpose.msra.mxu0 0
    %1297 = vmatprep.subr.bf16.mxu0 0
    %1298 = vmatpush1.bf16.xpose.msra.mxu0 0
    %1299 = vmatprep.subr.bf16.mxu0 0
    %1300 = vmatpush1.bf16.xpose.msra.mxu0 0
    %1301 = vmatprep.subr.bf16.mxu0 0
    %1302 = vmatpush1.bf16.xpose.msra.mxu0 0
    %1303 = vmatprep.subr.bf16.mxu0 0
    %1304 = vmatpush1.bf16.xpose.msra.mxu0 0
    %1305 = vmatprep.subr.bf16.mxu0 0
    %1306 = vmatpush1.bf16.xpose.msra.mxu0 0
    %1307 = vmatprep.subr.bf16.mxu0 0
    %1308 = vmatpush1.bf16.xpose.msra.mxu0 0
    %1309 = vmatprep.subr.bf16.mxu0 0
    %1310 = vmatpush1.bf16.xpose.msra.mxu0 0
    %1311 = vmatprep.subr.bf16.mxu0 0
    %1312 = vmatpush1.bf16.xpose.msra.mxu0 0
    %1313 = vmatprep.subr.bf16.mxu0 0
    %1314 = vmatpush1.bf16.xpose.msra.mxu0 0
    %1315 = vmatprep.subr.bf16.mxu0 0
    %1316 = vmatpush1.bf16.xpose.msra.mxu0 0
    %1317 = vmatprep.mubr.bf16.mxu0 %v922
    %1318 = vmatmul.mubr.bf16.gmra.mrb[0].mxu0 %v921
    %v1319 = vpop.f32.mrb[0].mxu0
    %v1320 = vadd.f32 %v1280, %v1319
    %v1321 = vpop.f32.mrb[0].mxu0
    %v1322 = vpop.f32.mrb[0].mxu0
    %v1323 = vpop.f32.mrb[0].mxu0
    %1324 = vdwg.mxu0
    %1325 = vmatprep.subr.bf16.mxu0 %v1072
    %1326 = vmatpush1.bf16.xpose.msra.mxu0 %v1071
    %1327 = vmatprep.subr.bf16.mxu0 %v1088
    %1328 = vmatpush1.bf16.xpose.msra.mxu0 %v1087
    %1329 = vmatprep.subr.bf16.mxu0 0
    %1330 = vmatpush1.bf16.xpose.msra.mxu0 0
    %1331 = vmatprep.subr.bf16.mxu0 0
    %1332 = vmatpush1.bf16.xpose.msra.mxu0 0
    %1333 = vmatprep.subr.bf16.mxu0 0
    %1334 = vmatpush1.bf16.xpose.msra.mxu0 0
    %1335 = vmatprep.subr.bf16.mxu0 0
    %1336 = vmatpush1.bf16.xpose.msra.mxu0 0
    %1337 = vmatprep.subr.bf16.mxu0 0
    %1338 = vmatpush1.bf16.xpose.msra.mxu0 0
    %1339 = vmatprep.subr.bf16.mxu0 0
    %1340 = vmatpush1.bf16.xpose.msra.mxu0 0
    %1341 = vmatprep.subr.bf16.mxu0 0
    %1342 = vmatpush1.bf16.xpose.msra.mxu0 0
    %1343 = vmatprep.subr.bf16.mxu0 0
    %1344 = vmatpush1.bf16.xpose.msra.mxu0 0
    %1345 = vmatprep.subr.bf16.mxu0 0
    %1346 = vmatpush1.bf16.xpose.msra.mxu0 0
    %1347 = vmatprep.subr.bf16.mxu0 0
    %1348 = vmatpush1.bf16.xpose.msra.mxu0 0
    %1349 = vmatprep.subr.bf16.mxu0 0
    %1350 = vmatpush1.bf16.xpose.msra.mxu0 0
    %1351 = vmatprep.subr.bf16.mxu0 0
    %1352 = vmatpush1.bf16.xpose.msra.mxu0 0
    %1353 = vmatprep.subr.bf16.mxu0 0
    %1354 = vmatpush1.bf16.xpose.msra.mxu0 0
    %1355 = vmatprep.subr.bf16.mxu0 0
    %1356 = vmatpush1.bf16.xpose.msra.mxu0 0
    %1357 = vmatprep.mubr.bf16.mxu0 %v924
    %1358 = vmatmul.mubr.bf16.gmra.mrb[0].mxu0 %v923
    %v1359 = vpop.f32.mrb[0].mxu0
    %v1360 = vadd.f32 %v1320, %v1359
    %v1361 = vpop.f32.mrb[0].mxu0
    %v1362 = vpop.f32.mrb[0].mxu0
    %v1363 = vpop.f32.mrb[0].mxu0
    %1364 = vdwg.mxu0
    %1365 = vmatprep.subr.bf16.mxu0 %v1074
    %1366 = vmatpush1.bf16.xpose.msra.mxu0 %v1073
    %1367 = vmatprep.subr.bf16.mxu0 %v1090
    %1368 = vmatpush1.bf16.xpose.msra.mxu0 %v1089
    %1369 = vmatprep.subr.bf16.mxu0 0
    %1370 = vmatpush1.bf16.xpose.msra.mxu0 0
    %1371 = vmatprep.subr.bf16.mxu0 0
    %1372 = vmatpush1.bf16.xpose.msra.mxu0 0
    %1373 = vmatprep.subr.bf16.mxu0 0
    %1374 = vmatpush1.bf16.xpose.msra.mxu0 0
    %1375 = vmatprep.subr.bf16.mxu0 0
    %1376 = vmatpush1.bf16.xpose.msra.mxu0 0
    %1377 = vmatprep.subr.bf16.mxu0 0
    %1378 = vmatpush1.bf16.xpose.msra.mxu0 0
    %1379 = vmatprep.subr.bf16.mxu0 0
    %1380 = vmatpush1.bf16.xpose.msra.mxu0 0
    %1381 = vmatprep.subr.bf16.mxu0 0
    %1382 = vmatpush1.bf16.xpose.msra.mxu0 0
    %1383 = vmatprep.subr.bf16.mxu0 0
    %1384 = vmatpush1.bf16.xpose.msra.mxu0 0
    %1385 = vmatprep.subr.bf16.mxu0 0
    %1386 = vmatpush1.bf16.xpose.msra.mxu0 0
    %1387 = vmatprep.subr.bf16.mxu0 0
    %1388 = vmatpush1.bf16.xpose.msra.mxu0 0
    %1389 = vmatprep.subr.bf16.mxu0 0
    %1390 = vmatpush1.bf16.xpose.msra.mxu0 0
    %1391 = vmatprep.subr.bf16.mxu0 0
    %1392 = vmatpush1.bf16.xpose.msra.mxu0 0
    %1393 = vmatprep.subr.bf16.mxu0 0
    %1394 = vmatpush1.bf16.xpose.msra.mxu0 0
    %1395 = vmatprep.subr.bf16.mxu0 0
    %1396 = vmatpush1.bf16.xpose.msra.mxu0 0
    %1397 = vmatprep.mubr.bf16.mxu0 %v926
    %1398 = vmatmul.mubr.bf16.gmra.mrb[0].mxu0 %v925
    %v1399 = vpop.f32.mrb[0].mxu0
    %v1400 = vadd.f32 %v1360, %v1399
    %v1401 = vpop.f32.mrb[0].mxu0
    %v1402 = vpop.f32.mrb[0].mxu0
    %v1403 = vpop.f32.mrb[0].mxu0
    %1404 = vdwg.mxu0
    %1405 = vmatprep.subr.bf16.mxu0 %v1076
    %1406 = vmatpush1.bf16.xpose.msra.mxu0 %v1075
    %1407 = vmatprep.subr.bf16.mxu0 %v1092
    %1408 = vmatpush1.bf16.xpose.msra.mxu0 %v1091
    %1409 = vmatprep.subr.bf16.mxu0 0
    %1410 = vmatpush1.bf16.xpose.msra.mxu0 0
    %1411 = vmatprep.subr.bf16.mxu0 0
    %1412 = vmatpush1.bf16.xpose.msra.mxu0 0
    %1413 = vmatprep.subr.bf16.mxu0 0
    %1414 = vmatpush1.bf16.xpose.msra.mxu0 0
    %1415 = vmatprep.subr.bf16.mxu0 0
    %1416 = vmatpush1.bf16.xpose.msra.mxu0 0
    %1417 = vmatprep.subr.bf16.mxu0 0
    %1418 = vmatpush1.bf16.xpose.msra.mxu0 0
    %1419 = vmatprep.subr.bf16.mxu0 0
    %1420 = vmatpush1.bf16.xpose.msra.mxu0 0
    %1421 = vmatprep.subr.bf16.mxu0 0
    %1422 = vmatpush1.bf16.xpose.msra.mxu0 0
    %1423 = vmatprep.subr.bf16.mxu0 0
    %1424 = vmatpush1.bf16.xpose.msra.mxu0 0
    %1425 = vmatprep.subr.bf16.mxu0 0
    %1426 = vmatpush1.bf16.xpose.msra.mxu0 0
    %1427 = vmatprep.subr.bf16.mxu0 0
    %1428 = vmatpush1.bf16.xpose.msra.mxu0 0
    %1429 = vmatprep.subr.bf16.mxu0 0
    %1430 = vmatpush1.bf16.xpose.msra.mxu0 0
    %1431 = vmatprep.subr.bf16.mxu0 0
    %1432 = vmatpush1.bf16.xpose.msra.mxu0 0
    %1433 = vmatprep.subr.bf16.mxu0 0
    %1434 = vmatpush1.bf16.xpose.msra.mxu0 0
    %1435 = vmatprep.subr.bf16.mxu0 0
    %1436 = vmatpush1.bf16.xpose.msra.mxu0 0
    %1437 = vmatprep.mubr.bf16.mxu0 %v928
    %1438 = vmatmul.mubr.bf16.gmra.mrb[0].mxu0 %v927
    %v1439 = vpop.f32.mrb[0].mxu0
    %v1440 = vadd.f32 %v1400, %v1439
    %v1441 = vpop.f32.mrb[0].mxu0
    %v1442 = vpop.f32.mrb[0].mxu0
    %v1443 = vpop.f32.mrb[0].mxu0
    %1444 = vdwg.mxu0
    %v1445 = vadd.f32 %v287, %v1440
    %v1446 = vsel %vm189, %v1445, 0.0
    %1447 = vadd.xlane.f32.xlu0 %v1446
    %v1448 = vpop.xlane.xlu0 %1447
    %v1449 = vmul.f32 %v1448, %v267
    %v1450 = vsub.f32 %v1445, %v1449
    %v1451 = vmul.f32 %v1450, %v1450
    %v1452 = vsel %vm189, %v1451, 0.0
    %1453 = vadd.xlane.f32.xlu0 %v1452
    %v1454 = vpop.xlane.xlu0 %1453
    %v1455 = vmul.f32 %v1454, %v267
    %v1456 = vadd.f32 %v1455, 1e-05
    %v1457 = vrsqrt.pop %v1456
    %v1458 = vmul.f32 %v1450, %v1457
    %v1459 = vlaneseq
    %v1460 = vshrl.u32 %v1459, 7
    %v1461 = vsub.s32 4, %v1460
    %v1462 = vrot.slane %v98, %v1461
    %v1463 = vmul.f32 %v1458, %v1462
    %v1464 = vlaneseq
    %v1465 = vshrl.u32 %v1464, 7
    %v1466 = vsub.s32 5, %v1465
    %v1467 = vrot.slane %v98, %v1466
    %v1468 = vadd.f32 %v1463, %v1467
    %s1469 = scalar_lea.vmem [#allocation7], 32
    %v1470 = vld [vmem:[%s1469] sm:$0xff]
    %v1471 = vld [vmem:[%s1469 + $0x8] sm:$0xff]
    %v1472 = vld [vmem:[%s1469 + $0x10] sm:$0xff]
    %v1473 = vld [vmem:[%s1469 + $0x18] sm:$0xff]
    %v1474 = vlaneseq
    %v1475 = vshrl.u32 %v1474, 7
    %v1476 = vsub.s32 0, %v1475
    %v1477 = vrot.slane %v99, %v1476
    %v1479 = vsel %vm189, %v1468, 0
    %1481 = vmatprep.subr.mxu0 0.0
    %1482 = vmatpush1.msra.mxu0 %v1470
    %1483 = vmatprep.subr.mxu0 0.0
    %1484 = vmatpush1.msra.mxu0 %v1471
    %1485 = vmatprep.subr.mxu0 0.0
    %1486 = vmatpush1.msra.mxu0 %v1472
    %1487 = vmatprep.subr.mxu0 0.0
    %1488 = vmatpush1.msra.mxu0 %v1473
    %1489 = vmatprep.subr.mxu0 0.0
    %1490 = vmatpush1.msra.mxu0 0.0
    %1491 = vmatprep.subr.mxu0 0.0
    %1492 = vmatpush1.msra.mxu0 0.0
    %1493 = vmatprep.subr.mxu0 0.0
    %1494 = vmatpush1.msra.mxu0 0.0
    %1495 = vmatprep.subr.mxu0 0.0
    %1496 = vmatpush1.msra.mxu0 0.0
    %1497 = vmatprep.subr.mxu0 0.0
    %1498 = vmatpush1.msra.mxu0 0.0
    %1499 = vmatprep.subr.mxu0 0.0
    %1500 = vmatpush1.msra.mxu0 0.0
    %1501 = vmatprep.subr.mxu0 0.0
    %1502 = vmatpush1.msra.mxu0 0.0
    %1503 = vmatprep.subr.mxu0 0.0
    %1504 = vmatpush1.msra.mxu0 0.0
    %1505 = vmatprep.subr.mxu0 0.0
    %1506 = vmatpush1.msra.mxu0 0.0
    %1507 = vmatprep.subr.mxu0 0.0
    %1508 = vmatpush1.msra.mxu0 0.0
    %1509 = vmatprep.subr.mxu0 0.0
    %1510 = vmatpush1.msra.mxu0 0.0
    %1511 = vmatprep.subr.mxu0 0.0
    %1512 = vmatpush1.msra.mxu0 0.0
    %1513 = vmatprep.subr.mxu0 0.0
    %1514 = vmatpush1.msra.mxu0 0.0
    %1515 = vmatprep.subr.mxu0 0.0
    %1516 = vmatpush1.msra.mxu0 0.0
    %1517 = vmatprep.subr.mxu0 0.0
    %1518 = vmatpush1.msra.mxu0 0.0
    %1519 = vmatprep.subr.mxu0 0.0
    %1520 = vmatpush1.msra.mxu0 0.0
    %1521 = vmatprep.subr.mxu0 0.0
    %1522 = vmatpush1.msra.mxu0 0.0
    %1523 = vmatprep.subr.mxu0 0.0
    %1524 = vmatpush1.msra.mxu0 0.0
    %1525 = vmatprep.subr.mxu0 0.0
    %1526 = vmatpush1.msra.mxu0 0.0
    %1527 = vmatprep.subr.mxu0 0.0
    %1528 = vmatpush1.msra.mxu0 0.0
    %1529 = vmatprep.subr.mxu0 0.0
    %1530 = vmatpush1.msra.mxu0 0.0
    %1531 = vmatprep.subr.mxu0 0.0
    %1532 = vmatpush1.msra.mxu0 0.0
    %1533 = vmatprep.subr.mxu0 0.0
    %1534 = vmatpush1.msra.mxu0 0.0
    %1535 = vmatprep.subr.mxu0 0.0
    %1536 = vmatpush1.msra.mxu0 0.0
    %1537 = vmatprep.subr.mxu0 0.0
    %1538 = vmatpush1.msra.mxu0 0.0
    %1539 = vmatprep.subr.mxu0 0.0
    %1540 = vmatpush1.msra.mxu0 0.0
    %1541 = vmatprep.subr.mxu0 0.0
    %1542 = vmatpush1.msra.mxu0 0.0
    %1543 = vmatprep.subr.mxu0 0.0
    %1544 = vmatpush1.msra.mxu0 0.0
    %1545 = vmatprep.mubr.f32.mxu0 0.0
    %1546 = vmatmul.mubr.f32.gmra.mrb[0].mxu0 %v1479
    %v1547 = vpop.f32.mrb[0].mxu0
    %v1548 = vadd.f32 %v1477, %v1547
    %v1549 = vpop.f32.mrb[0].mxu0
    %1550 = vdwg.mxu0
    %v1551 = vadd.f32 %v1468, %v1548
    %v1552 = vsel %vm189, %v1551, 0.0
    %1553 = vadd.xlane.f32.xlu0 %v1552
    %v1554 = vpop.xlane.xlu0 %1553
    %v1555 = vmul.f32 %v1554, %v267
    %v1556 = vsub.f32 %v1551, %v1555
    %v1557 = vmul.f32 %v1556, %v1556
    %v1558 = vsel %vm189, %v1557, 0.0
    %1559 = vadd.xlane.f32.xlu0 %v1558
    %v1560 = vpop.xlane.xlu0 %1559
    %v1561 = vmul.f32 %v1560, %v267
    %v1562 = vadd.f32 %v1561, 1e-05
    %v1563 = vrsqrt.pop %v1562
    %v1564 = vmul.f32 %v1556, %v1563
    %v1565 = vlaneseq
    %v1566 = vshrl.u32 %v1565, 7
    %v1567 = vsub.s32 2, %v1566
    %v1568 = vrot.slane %v99, %v1567
    %v1569 = vmul.f32 %v1564, %v1568
    %v1570 = vlaneseq
    %v1571 = vshrl.u32 %v1570, 7
    %v1572 = vsub.s32 3, %v1571
    %v1573 = vrot.slane %v99, %v1572
    %v1574 = vadd.f32 %v1569, %v1573
    %v1575 = vpack.c.bf16 %v1574, %v1574
    %s1576 = scalar_lea.vmem [#allocation8], 256
    %v1577 = vld [vmem:[%s1576] sm:$0xff]
    %v1578 = vld [vmem:[%s1576 + $0x8] sm:$0xff]
    %v1579 = vld [vmem:[%s1576 + $0x10] sm:$0xff]
    %v1580 = vld [vmem:[%s1576 + $0x18] sm:$0xff]
    %v1581 = vld [vmem:[%s1576 + $0x20] sm:$0xff]
    %v1582 = vld [vmem:[%s1576 + $0x28] sm:$0xff]
    %v1583 = vld [vmem:[%s1576 + $0x30] sm:$0xff]
    %v1584 = vld [vmem:[%s1576 + $0x38] sm:$0xff]
    %v1585 = vld [vmem:[%s1576 + $0x40] sm:$0xff]
    %v1586 = vld [vmem:[%s1576 + $0x48] sm:$0xff]
    %v1587 = vld [vmem:[%s1576 + $0x50] sm:$0xff]
    %v1588 = vld [vmem:[%s1576 + $0x58] sm:$0xff]
    %v1589 = vld [vmem:[%s1576 + $0x60] sm:$0xff]
    %v1590 = vld [vmem:[%s1576 + $0x68] sm:$0xff]
    %v1591 = vld [vmem:[%s1576 + $0x70] sm:$0xff]
    %v1592 = vld [vmem:[%s1576 + $0x78] sm:$0xff]
    %v1593 = vld [vmem:[%s1576 + $0x80] sm:$0xff]
    %v1594 = vld [vmem:[%s1576 + $0x88] sm:$0xff]
    %v1595 = vld [vmem:[%s1576 + $0x90] sm:$0xff]
    %v1596 = vld [vmem:[%s1576 + $0x98] sm:$0xff]
    %v1597 = vld [vmem:[%s1576 + $0xa0] sm:$0xff]
    %v1598 = vld [vmem:[%s1576 + $0xa8] sm:$0xff]
    %v1599 = vld [vmem:[%s1576 + $0xb0] sm:$0xff]
    %v1600 = vld [vmem:[%s1576 + $0xb8] sm:$0xff]
    %v1601 = vld [vmem:[%s1576 + $0xc0] sm:$0xff]
    %v1602 = vld [vmem:[%s1576 + $0xc8] sm:$0xff]
    %v1603 = vld [vmem:[%s1576 + $0xd0] sm:$0xff]
    %v1604 = vld [vmem:[%s1576 + $0xd8] sm:$0xff]
    %v1605 = vld [vmem:[%s1576 + $0xe0] sm:$0xff]
    %v1606 = vld [vmem:[%s1576 + $0xe8] sm:$0xff]
    %v1607 = vld [vmem:[%s1576 + $0xf0] sm:$0xff]
    %v1608 = vld [vmem:[%s1576 + $0xf8] sm:$0xff]
    %s1609 = scalar_lea.vmem %s4, 1
    %v1610 = vld [vmem:[%s1609] ss:$2 sm:$0xff]
    %s1611 = scalar_lea.vmem %s4, 17
    %v1612 = vld [vmem:[%s1611] ss:$2 sm:$0xff]
    %v1615 = vlaneseq
    %v1616 = vshrl.u32 %v1615, 7
    %v1617 = vsub.s32 0, %v1616
    %v1618 = vrot.slane %v1610, %v1617
    %v1619 = vlaneseq
    %v1620 = vshrl.u32 %v1619, 7
    %v1621 = vsub.s32 1, %v1620
    %v1622 = vrot.slane %v1610, %v1621
    %v1623 = vlaneseq
    %v1624 = vshrl.u32 %v1623, 7
    %v1625 = vsub.s32 2, %v1624
    %v1626 = vrot.slane %v1610, %v1625
    %v1627 = vlaneseq
    %v1628 = vshrl.u32 %v1627, 7
    %v1629 = vsub.s32 3, %v1628
    %v1630 = vrot.slane %v1610, %v1629
    %v1631 = vlaneseq
    %v1632 = vshrl.u32 %v1631, 7
    %v1633 = vsub.s32 4, %v1632
    %v1634 = vrot.slane %v1610, %v1633
    %v1635 = vlaneseq
    %v1636 = vshrl.u32 %v1635, 7
    %v1637 = vsub.s32 5, %v1636
    %v1638 = vrot.slane %v1610, %v1637
    %v1639 = vlaneseq
    %v1640 = vshrl.u32 %v1639, 7
    %v1641 = vsub.s32 6, %v1640
    %v1642 = vrot.slane %v1610, %v1641
    %v1643 = vlaneseq
    %v1644 = vshrl.u32 %v1643, 7
    %v1645 = vsub.s32 7, %v1644
    %v1646 = vrot.slane %v1610, %v1645
    %v1647 = vlaneseq
    %v1648 = vshrl.u32 %v1647, 7
    %v1649 = vsub.s32 0, %v1648
    %v1650 = vrot.slane %v1612, %v1649
    %v1651 = vlaneseq
    %v1652 = vshrl.u32 %v1651, 7
    %v1653 = vsub.s32 1, %v1652
    %v1654 = vrot.slane %v1612, %v1653
    %v1655 = vlaneseq
    %v1656 = vshrl.u32 %v1655, 7
    %v1657 = vsub.s32 2, %v1656
    %v1658 = vrot.slane %v1612, %v1657
    %v1659 = vlaneseq
    %v1660 = vshrl.u32 %v1659, 7
    %v1661 = vsub.s32 3, %v1660
    %v1662 = vrot.slane %v1612, %v1661
    %v1663 = vlaneseq
    %v1664 = vshrl.u32 %v1663, 7
    %v1665 = vsub.s32 4, %v1664
    %v1666 = vrot.slane %v1612, %v1665
    %v1667 = vlaneseq
    %v1668 = vshrl.u32 %v1667, 7
    %v1669 = vsub.s32 5, %v1668
    %v1670 = vrot.slane %v1612, %v1669
    %v1671 = vlaneseq
    %v1672 = vshrl.u32 %v1671, 7
    %v1673 = vsub.s32 6, %v1672
    %v1674 = vrot.slane %v1612, %v1673
    %v1675 = vlaneseq
    %v1676 = vshrl.u32 %v1675, 7
    %v1677 = vsub.s32 7, %v1676
    %v1678 = vrot.slane %v1612, %v1677
    %v1727 = vunpack.c.l.b16 %v1577
    %v1728 = vunpack.c.h.b16 %v1577
    %v1729 = vunpack.c.l.b16 %v1578
    %v1730 = vunpack.c.h.b16 %v1578
    %v1731 = vunpack.c.l.b16 %v1579
    %v1732 = vunpack.c.h.b16 %v1579
    %v1733 = vunpack.c.l.b16 %v1580
    %v1734 = vunpack.c.h.b16 %v1580
    %v1735 = vunpack.c.l.b16 %v1581
    %v1736 = vunpack.c.h.b16 %v1581
    %v1737 = vunpack.c.l.b16 %v1582
    %v1738 = vunpack.c.h.b16 %v1582
    %v1739 = vunpack.c.l.b16 %v1583
    %v1740 = vunpack.c.h.b16 %v1583
    %v1741 = vunpack.c.l.b16 %v1584
    %v1742 = vunpack.c.h.b16 %v1584
    %v1743 = vunpack.c.l.b16 %v1585
    %v1744 = vunpack.c.h.b16 %v1585
    %v1745 = vunpack.c.l.b16 %v1586
    %v1746 = vunpack.c.h.b16 %v1586
    %v1747 = vunpack.c.l.b16 %v1587
    %v1748 = vunpack.c.h.b16 %v1587
    %v1749 = vunpack.c.l.b16 %v1588
    %v1750 = vunpack.c.h.b16 %v1588
    %v1751 = vunpack.c.l.b16 %v1589
    %v1752 = vunpack.c.h.b16 %v1589
    %v1753 = vunpack.c.l.b16 %v1590
    %v1754 = vunpack.c.h.b16 %v1590
    %v1755 = vunpack.c.l.b16 %v1591
    %v1756 = vunpack.c.h.b16 %v1591
    %v1757 = vunpack.c.l.b16 %v1592
    %v1758 = vunpack.c.h.b16 %v1592
    %v1759 = vunpack.c.l.b16 %v1593
    %v1760 = vunpack.c.h.b16 %v1593
    %v1761 = vunpack.c.l.b16 %v1594
    %v1762 = vunpack.c.h.b16 %v1594
    %v1763 = vunpack.c.l.b16 %v1595
    %v1764 = vunpack.c.h.b16 %v1595
    %v1765 = vunpack.c.l.b16 %v1596
    %v1766 = vunpack.c.h.b16 %v1596
    %v1767 = vunpack.c.l.b16 %v1597
    %v1768 = vunpack.c.h.b16 %v1597
    %v1769 = vunpack.c.l.b16 %v1598
    %v1770 = vunpack.c.h.b16 %v1598
    %v1771 = vunpack.c.l.b16 %v1599
    %v1772 = vunpack.c.h.b16 %v1599
    %v1773 = vunpack.c.l.b16 %v1600
    %v1774 = vunpack.c.h.b16 %v1600
    %v1775 = vunpack.c.l.b16 %v1601
    %v1776 = vunpack.c.h.b16 %v1601
    %v1777 = vunpack.c.l.b16 %v1602
    %v1778 = vunpack.c.h.b16 %v1602
    %v1779 = vunpack.c.l.b16 %v1603
    %v1780 = vunpack.c.h.b16 %v1603
    %v1781 = vunpack.c.l.b16 %v1604
    %v1782 = vunpack.c.h.b16 %v1604
    %v1783 = vunpack.c.l.b16 %v1605
    %v1784 = vunpack.c.h.b16 %v1605
    %v1785 = vunpack.c.l.b16 %v1606
    %v1786 = vunpack.c.h.b16 %v1606
    %v1787 = vunpack.c.l.b16 %v1607
    %v1788 = vunpack.c.h.b16 %v1607
    %v1789 = vunpack.c.l.b16 %v1608
    %v1790 = vunpack.c.h.b16 %v1608
    %v1791 = vpack.c.b16 %v1743, %v1727
    %v1792 = vpack.c.b16 %v1744, %v1728
    %v1793 = vpack.c.b16 %v1745, %v1729
    %v1794 = vpack.c.b16 %v1746, %v1730
    %v1795 = vpack.c.b16 %v1747, %v1731
    %v1796 = vpack.c.b16 %v1748, %v1732
    %v1797 = vpack.c.b16 %v1749, %v1733
    %v1798 = vpack.c.b16 %v1750, %v1734
    %v1799 = vpack.c.b16 %v1751, %v1735
    %v1800 = vpack.c.b16 %v1752, %v1736
    %v1801 = vpack.c.b16 %v1753, %v1737
    %v1802 = vpack.c.b16 %v1754, %v1738
    %v1803 = vpack.c.b16 %v1755, %v1739
    %v1804 = vpack.c.b16 %v1756, %v1740
    %v1805 = vpack.c.b16 %v1757, %v1741
    %v1806 = vpack.c.b16 %v1758, %v1742
    %v1807 = vpack.c.b16 %v1775, %v1759
    %v1808 = vpack.c.b16 %v1776, %v1760
    %v1809 = vpack.c.b16 %v1777, %v1761
    %v1810 = vpack.c.b16 %v1778, %v1762
    %v1811 = vpack.c.b16 %v1779, %v1763
    %v1812 = vpack.c.b16 %v1780, %v1764
    %v1813 = vpack.c.b16 %v1781, %v1765
    %v1814 = vpack.c.b16 %v1782, %v1766
    %v1815 = vpack.c.b16 %v1783, %v1767
    %v1816 = vpack.c.b16 %v1784, %v1768
    %v1817 = vpack.c.b16 %v1785, %v1769
    %v1818 = vpack.c.b16 %v1786, %v1770
    %v1819 = vpack.c.b16 %v1787, %v1771
    %v1820 = vpack.c.b16 %v1788, %v1772
    %v1821 = vpack.c.b16 %v1789, %v1773
    %v1822 = vpack.c.b16 %v1790, %v1774
    %v1856 = vsel %vm189, %v1575, 0
    %1858 = vmatprep.subr.bf16.mxu0 %v1792
    %1859 = vmatpush1.bf16.msra.mxu0 %v1791
    %1860 = vmatprep.subr.bf16.mxu0 %v1808
    %1861 = vmatpush1.bf16.msra.mxu0 %v1807
    %1862 = vmatprep.subr.bf16.mxu0 0
    %1863 = vmatpush1.bf16.msra.mxu0 0
    %1864 = vmatprep.subr.bf16.mxu0 0
    %1865 = vmatpush1.bf16.msra.mxu0 0
    %1866 = vmatprep.subr.bf16.mxu0 0
    %1867 = vmatpush1.bf16.msra.mxu0 0
    %1868 = vmatprep.subr.bf16.mxu0 0
    %1869 = vmatpush1.bf16.msra.mxu0 0
    %1870 = vmatprep.subr.bf16.mxu0 0
    %1871 = vmatpush1.bf16.msra.mxu0 0
    %1872 = vmatprep.subr.bf16.mxu0 0
    %1873 = vmatpush1.bf16.msra.mxu0 0
    %1874 = vmatprep.subr.bf16.mxu0 0
    %1875 = vmatpush1.bf16.msra.mxu0 0
    %1876 = vmatprep.subr.bf16.mxu0 0
    %1877 = vmatpush1.bf16.msra.mxu0 0
    %1878 = vmatprep.subr.bf16.mxu0 0
    %1879 = vmatpush1.bf16.msra.mxu0 0
    %1880 = vmatprep.subr.bf16.mxu0 0
    %1881 = vmatpush1.bf16.msra.mxu0 0
    %1882 = vmatprep.subr.bf16.mxu0 0
    %1883 = vmatpush1.bf16.msra.mxu0 0
    %1884 = vmatprep.subr.bf16.mxu0 0
    %1885 = vmatpush1.bf16.msra.mxu0 0
    %1886 = vmatprep.subr.bf16.mxu0 0
    %1887 = vmatpush1.bf16.msra.mxu0 0
    %1888 = vmatprep.subr.bf16.mxu0 0
    %1889 = vmatpush1.bf16.msra.mxu0 0
    %1890 = vmatprep.mubr.bf16.mxu0 0
    %1891 = vmatmul.mubr.bf16.gmra.mrb[0].mxu0 %v1856
    %v1892 = vpop.f32.mrb[0].mxu0
    %v1893 = vadd.f32 %v1618, %v1892
    %v1894 = vpop.f32.mrb[0].mxu0
    %v1895 = vadd.f32 %v1622, %v1894
    %v1896 = vpop.f32.mrb[0].mxu0
    %v1897 = vpop.f32.mrb[0].mxu0
    %1898 = vdwg.mxu0
    %1899 = vmatprep.subr.bf16.mxu0 %v1794
    %1900 = vmatpush1.bf16.msra.mxu0 %v1793
    %1901 = vmatprep.subr.bf16.mxu0 %v1810
    %1902 = vmatpush1.bf16.msra.mxu0 %v1809
    %1903 = vmatprep.subr.bf16.mxu0 0
    %1904 = vmatpush1.bf16.msra.mxu0 0
    %1905 = vmatprep.subr.bf16.mxu0 0
    %1906 = vmatpush1.bf16.msra.mxu0 0
    %1907 = vmatprep.subr.bf16.mxu0 0
    %1908 = vmatpush1.bf16.msra.mxu0 0
    %1909 = vmatprep.subr.bf16.mxu0 0
    %1910 = vmatpush1.bf16.msra.mxu0 0
    %1911 = vmatprep.subr.bf16.mxu0 0
    %1912 = vmatpush1.bf16.msra.mxu0 0
    %1913 = vmatprep.subr.bf16.mxu0 0
    %1914 = vmatpush1.bf16.msra.mxu0 0
    %1915 = vmatprep.subr.bf16.mxu0 0
    %1916 = vmatpush1.bf16.msra.mxu0 0
    %1917 = vmatprep.subr.bf16.mxu0 0
    %1918 = vmatpush1.bf16.msra.mxu0 0
    %1919 = vmatprep.subr.bf16.mxu0 0
    %1920 = vmatpush1.bf16.msra.mxu0 0
    %1921 = vmatprep.subr.bf16.mxu0 0
    %1922 = vmatpush1.bf16.msra.mxu0 0
    %1923 = vmatprep.subr.bf16.mxu0 0
    %1924 = vmatpush1.bf16.msra.mxu0 0
    %1925 = vmatprep.subr.bf16.mxu0 0
    %1926 = vmatpush1.bf16.msra.mxu0 0
    %1927 = vmatprep.subr.bf16.mxu0 0
    %1928 = vmatpush1.bf16.msra.mxu0 0
    %1929 = vmatprep.subr.bf16.mxu0 0
    %1930 = vmatpush1.bf16.msra.mxu0 0
    %1931 = vmatprep.mubr.bf16.mxu0 0
    %1932 = vmatmul.mubr.bf16.gmra.mrb[0].mxu0 %v1856
    %v1933 = vpop.f32.mrb[0].mxu0
    %v1934 = vadd.f32 %v1626, %v1933
    %v1935 = vpop.f32.mrb[0].mxu0
    %v1936 = vadd.f32 %v1630, %v1935
    %v1937 = vpop.f32.mrb[0].mxu0
    %v1938 = vpop.f32.mrb[0].mxu0
    %1939 = vdwg.mxu0
    %1940 = vmatprep.subr.bf16.mxu0 %v1796
    %1941 = vmatpush1.bf16.msra.mxu0 %v1795
    %1942 = vmatprep.subr.bf16.mxu0 %v1812
    %1943 = vmatpush1.bf16.msra.mxu0 %v1811
    %1944 = vmatprep.subr.bf16.mxu0 0
    %1945 = vmatpush1.bf16.msra.mxu0 0
    %1946 = vmatprep.subr.bf16.mxu0 0
    %1947 = vmatpush1.bf16.msra.mxu0 0
    %1948 = vmatprep.subr.bf16.mxu0 0
    %1949 = vmatpush1.bf16.msra.mxu0 0
    %1950 = vmatprep.subr.bf16.mxu0 0
    %1951 = vmatpush1.bf16.msra.mxu0 0
    %1952 = vmatprep.subr.bf16.mxu0 0
    %1953 = vmatpush1.bf16.msra.mxu0 0
    %1954 = vmatprep.subr.bf16.mxu0 0
    %1955 = vmatpush1.bf16.msra.mxu0 0
    %1956 = vmatprep.subr.bf16.mxu0 0
    %1957 = vmatpush1.bf16.msra.mxu0 0
    %1958 = vmatprep.subr.bf16.mxu0 0
    %1959 = vmatpush1.bf16.msra.mxu0 0
    %1960 = vmatprep.subr.bf16.mxu0 0
    %1961 = vmatpush1.bf16.msra.mxu0 0
    %1962 = vmatprep.subr.bf16.mxu0 0
    %1963 = vmatpush1.bf16.msra.mxu0 0
    %1964 = vmatprep.subr.bf16.mxu0 0
    %1965 = vmatpush1.bf16.msra.mxu0 0
    %1966 = vmatprep.subr.bf16.mxu0 0
    %1967 = vmatpush1.bf16.msra.mxu0 0
    %1968 = vmatprep.subr.bf16.mxu0 0
    %1969 = vmatpush1.bf16.msra.mxu0 0
    %1970 = vmatprep.subr.bf16.mxu0 0
    %1971 = vmatpush1.bf16.msra.mxu0 0
    %1972 = vmatprep.mubr.bf16.mxu0 0
    %1973 = vmatmul.mubr.bf16.gmra.mrb[0].mxu0 %v1856
    %v1974 = vpop.f32.mrb[0].mxu0
    %v1975 = vadd.f32 %v1634, %v1974
    %v1976 = vpop.f32.mrb[0].mxu0
    %v1977 = vadd.f32 %v1638, %v1976
    %v1978 = vpop.f32.mrb[0].mxu0
    %v1979 = vpop.f32.mrb[0].mxu0
    %1980 = vdwg.mxu0
    %1981 = vmatprep.subr.bf16.mxu0 %v1798
    %1982 = vmatpush1.bf16.msra.mxu0 %v1797
    %1983 = vmatprep.subr.bf16.mxu0 %v1814
    %1984 = vmatpush1.bf16.msra.mxu0 %v1813
    %1985 = vmatprep.subr.bf16.mxu0 0
    %1986 = vmatpush1.bf16.msra.mxu0 0
    %1987 = vmatprep.subr.bf16.mxu0 0
    %1988 = vmatpush1.bf16.msra.mxu0 0
    %1989 = vmatprep.subr.bf16.mxu0 0
    %1990 = vmatpush1.bf16.msra.mxu0 0
    %1991 = vmatprep.subr.bf16.mxu0 0
    %1992 = vmatpush1.bf16.msra.mxu0 0
    %1993 = vmatprep.subr.bf16.mxu0 0
    %1994 = vmatpush1.bf16.msra.mxu0 0
    %1995 = vmatprep.subr.bf16.mxu0 0
    %1996 = vmatpush1.bf16.msra.mxu0 0
    %1997 = vmatprep.subr.bf16.mxu0 0
    %1998 = vmatpush1.bf16.msra.mxu0 0
    %1999 = vmatprep.subr.bf16.mxu0 0
    %2000 = vmatpush1.bf16.msra.mxu0 0
    %2001 = vmatprep.subr.bf16.mxu0 0
    %2002 = vmatpush1.bf16.msra.mxu0 0
    %2003 = vmatprep.subr.bf16.mxu0 0
    %2004 = vmatpush1.bf16.msra.mxu0 0
    %2005 = vmatprep.subr.bf16.mxu0 0
    %2006 = vmatpush1.bf16.msra.mxu0 0
    %2007 = vmatprep.subr.bf16.mxu0 0
    %2008 = vmatpush1.bf16.msra.mxu0 0
    %2009 = vmatprep.subr.bf16.mxu0 0
    %2010 = vmatpush1.bf16.msra.mxu0 0
    %2011 = vmatprep.subr.bf16.mxu0 0
    %2012 = vmatpush1.bf16.msra.mxu0 0
    %2013 = vmatprep.mubr.bf16.mxu0 0
    %2014 = vmatmul.mubr.bf16.gmra.mrb[0].mxu0 %v1856
    %v2015 = vpop.f32.mrb[0].mxu0
    %v2016 = vadd.f32 %v1642, %v2015
    %v2017 = vpop.f32.mrb[0].mxu0
    %v2018 = vadd.f32 %v1646, %v2017
    %v2019 = vpop.f32.mrb[0].mxu0
    %v2020 = vpop.f32.mrb[0].mxu0
    %2021 = vdwg.mxu0
    %2022 = vmatprep.subr.bf16.mxu0 %v1800
    %2023 = vmatpush1.bf16.msra.mxu0 %v1799
    %2024 = vmatprep.subr.bf16.mxu0 %v1816
    %2025 = vmatpush1.bf16.msra.mxu0 %v1815
    %2026 = vmatprep.subr.bf16.mxu0 0
    %2027 = vmatpush1.bf16.msra.mxu0 0
    %2028 = vmatprep.subr.bf16.mxu0 0
    %2029 = vmatpush1.bf16.msra.mxu0 0
    %2030 = vmatprep.subr.bf16.mxu0 0
    %2031 = vmatpush1.bf16.msra.mxu0 0
    %2032 = vmatprep.subr.bf16.mxu0 0
    %2033 = vmatpush1.bf16.msra.mxu0 0
    %2034 = vmatprep.subr.bf16.mxu0 0
    %2035 = vmatpush1.bf16.msra.mxu0 0
    %2036 = vmatprep.subr.bf16.mxu0 0
    %2037 = vmatpush1.bf16.msra.mxu0 0
    %2038 = vmatprep.subr.bf16.mxu0 0
    %2039 = vmatpush1.bf16.msra.mxu0 0
    %2040 = vmatprep.subr.bf16.mxu0 0
    %2041 = vmatpush1.bf16.msra.mxu0 0
    %2042 = vmatprep.subr.bf16.mxu0 0
    %2043 = vmatpush1.bf16.msra.mxu0 0
    %2044 = vmatprep.subr.bf16.mxu0 0
    %2045 = vmatpush1.bf16.msra.mxu0 0
    %2046 = vmatprep.subr.bf16.mxu0 0
    %2047 = vmatpush1.bf16.msra.mxu0 0
    %2048 = vmatprep.subr.bf16.mxu0 0
    %2049 = vmatpush1.bf16.msra.mxu0 0
    %2050 = vmatprep.subr.bf16.mxu0 0
    %2051 = vmatpush1.bf16.msra.mxu0 0
    %2052 = vmatprep.subr.bf16.mxu0 0
    %2053 = vmatpush1.bf16.msra.mxu0 0
    %2054 = vmatprep.mubr.bf16.mxu0 0
    %2055 = vmatmul.mubr.bf16.gmra.mrb[0].mxu0 %v1856
    %v2056 = vpop.f32.mrb[0].mxu0
    %v2057 = vadd.f32 %v1650, %v2056
    %v2058 = vpop.f32.mrb[0].mxu0
    %v2059 = vadd.f32 %v1654, %v2058
    %v2060 = vpop.f32.mrb[0].mxu0
    %v2061 = vpop.f32.mrb[0].mxu0
    %2062 = vdwg.mxu0
    %2063 = vmatprep.subr.bf16.mxu0 %v1802
    %2064 = vmatpush1.bf16.msra.mxu0 %v1801
    %2065 = vmatprep.subr.bf16.mxu0 %v1818
    %2066 = vmatpush1.bf16.msra.mxu0 %v1817
    %2067 = vmatprep.subr.bf16.mxu0 0
    %2068 = vmatpush1.bf16.msra.mxu0 0
    %2069 = vmatprep.subr.bf16.mxu0 0
    %2070 = vmatpush1.bf16.msra.mxu0 0
    %2071 = vmatprep.subr.bf16.mxu0 0
    %2072 = vmatpush1.bf16.msra.mxu0 0
    %2073 = vmatprep.subr.bf16.mxu0 0
    %2074 = vmatpush1.bf16.msra.mxu0 0
    %2075 = vmatprep.subr.bf16.mxu0 0
    %2076 = vmatpush1.bf16.msra.mxu0 0
    %2077 = vmatprep.subr.bf16.mxu0 0
    %2078 = vmatpush1.bf16.msra.mxu0 0
    %2079 = vmatprep.subr.bf16.mxu0 0
    %2080 = vmatpush1.bf16.msra.mxu0 0
    %2081 = vmatprep.subr.bf16.mxu0 0
    %2082 = vmatpush1.bf16.msra.mxu0 0
    %2083 = vmatprep.subr.bf16.mxu0 0
    %2084 = vmatpush1.bf16.msra.mxu0 0
    %2085 = vmatprep.subr.bf16.mxu0 0
    %2086 = vmatpush1.bf16.msra.mxu0 0
    %2087 = vmatprep.subr.bf16.mxu0 0
    %2088 = vmatpush1.bf16.msra.mxu0 0
    %2089 = vmatprep.subr.bf16.mxu0 0
    %2090 = vmatpush1.bf16.msra.mxu0 0
    %2091 = vmatprep.subr.bf16.mxu0 0
    %2092 = vmatpush1.bf16.msra.mxu0 0
    %2093 = vmatprep.subr.bf16.mxu0 0
    %2094 = vmatpush1.bf16.msra.mxu0 0
    %2095 = vmatprep.mubr.bf16.mxu0 0
    %2096 = vmatmul.mubr.bf16.gmra.mrb[0].mxu0 %v1856
    %v2097 = vpop.f32.mrb[0].mxu0
    %v2098 = vadd.f32 %v1658, %v2097
    %v2099 = vpop.f32.mrb[0].mxu0
    %v2100 = vadd.f32 %v1662, %v2099
    %v2101 = vpop.f32.mrb[0].mxu0
    %v2102 = vpop.f32.mrb[0].mxu0
    %2103 = vdwg.mxu0
    %2104 = vmatprep.subr.bf16.mxu0 %v1804
    %2105 = vmatpush1.bf16.msra.mxu0 %v1803
    %2106 = vmatprep.subr.bf16.mxu0 %v1820
    %2107 = vmatpush1.bf16.msra.mxu0 %v1819
    %2108 = vmatprep.subr.bf16.mxu0 0
    %2109 = vmatpush1.bf16.msra.mxu0 0
    %2110 = vmatprep.subr.bf16.mxu0 0
    %2111 = vmatpush1.bf16.msra.mxu0 0
    %2112 = vmatprep.subr.bf16.mxu0 0
    %2113 = vmatpush1.bf16.msra.mxu0 0
    %2114 = vmatprep.subr.bf16.mxu0 0
    %2115 = vmatpush1.bf16.msra.mxu0 0
    %2116 = vmatprep.subr.bf16.mxu0 0
    %2117 = vmatpush1.bf16.msra.mxu0 0
    %2118 = vmatprep.subr.bf16.mxu0 0
    %2119 = vmatpush1.bf16.msra.mxu0 0
    %2120 = vmatprep.subr.bf16.mxu0 0
    %2121 = vmatpush1.bf16.msra.mxu0 0
    %2122 = vmatprep.subr.bf16.mxu0 0
    %2123 = vmatpush1.bf16.msra.mxu0 0
    %2124 = vmatprep.subr.bf16.mxu0 0
    %2125 = vmatpush1.bf16.msra.mxu0 0
    %2126 = vmatprep.subr.bf16.mxu0 0
    %2127 = vmatpush1.bf16.msra.mxu0 0
    %2128 = vmatprep.subr.bf16.mxu0 0
    %2129 = vmatpush1.bf16.msra.mxu0 0
    %2130 = vmatprep.subr.bf16.mxu0 0
    %2131 = vmatpush1.bf16.msra.mxu0 0
    %2132 = vmatprep.subr.bf16.mxu0 0
    %2133 = vmatpush1.bf16.msra.mxu0 0
    %2134 = vmatprep.subr.bf16.mxu0 0
    %2135 = vmatpush1.bf16.msra.mxu0 0
    %2136 = vmatprep.mubr.bf16.mxu0 0
    %2137 = vmatmul.mubr.bf16.gmra.mrb[0].mxu0 %v1856
    %v2138 = vpop.f32.mrb[0].mxu0
    %v2139 = vadd.f32 %v1666, %v2138
    %v2140 = vpop.f32.mrb[0].mxu0
    %v2141 = vadd.f32 %v1670, %v2140
    %v2142 = vpop.f32.mrb[0].mxu0
    %v2143 = vpop.f32.mrb[0].mxu0
    %2144 = vdwg.mxu0
    %2145 = vmatprep.subr.bf16.mxu0 %v1806
    %2146 = vmatpush1.bf16.msra.mxu0 %v1805
    %2147 = vmatprep.subr.bf16.mxu0 %v1822
    %2148 = vmatpush1.bf16.msra.mxu0 %v1821
    %2149 = vmatprep.subr.bf16.mxu0 0
    %2150 = vmatpush1.bf16.msra.mxu0 0
    %2151 = vmatprep.subr.bf16.mxu0 0
    %2152 = vmatpush1.bf16.msra.mxu0 0
    %2153 = vmatprep.subr.bf16.mxu0 0
    %2154 = vmatpush1.bf16.msra.mxu0 0
    %2155 = vmatprep.subr.bf16.mxu0 0
    %2156 = vmatpush1.bf16.msra.mxu0 0
    %2157 = vmatprep.subr.bf16.mxu0 0
    %2158 = vmatpush1.bf16.msra.mxu0 0
    %2159 = vmatprep.subr.bf16.mxu0 0
    %2160 = vmatpush1.bf16.msra.mxu0 0
    %2161 = vmatprep.subr.bf16.mxu0 0
    %2162 = vmatpush1.bf16.msra.mxu0 0
    %2163 = vmatprep.subr.bf16.mxu0 0
    %2164 = vmatpush1.bf16.msra.mxu0 0
    %2165 = vmatprep.subr.bf16.mxu0 0
    %2166 = vmatpush1.bf16.msra.mxu0 0
    %2167 = vmatprep.subr.bf16.mxu0 0
    %2168 = vmatpush1.bf16.msra.mxu0 0
    %2169 = vmatprep.subr.bf16.mxu0 0
    %2170 = vmatpush1.bf16.msra.mxu0 0
    %2171 = vmatprep.subr.bf16.mxu0 0
    %2172 = vmatpush1.bf16.msra.mxu0 0
    %2173 = vmatprep.subr.bf16.mxu0 0
    %2174 = vmatpush1.bf16.msra.mxu0 0
    %2175 = vmatprep.subr.bf16.mxu0 0
    %2176 = vmatpush1.bf16.msra.mxu0 0
    %2177 = vmatprep.mubr.bf16.mxu0 0
    %2178 = vmatmul.mubr.bf16.gmra.mrb[0].mxu0 %v1856
    %v2179 = vpop.f32.mrb[0].mxu0
    %v2180 = vadd.f32 %v1674, %v2179
    %v2181 = vpop.f32.mrb[0].mxu0
    %v2182 = vadd.f32 %v1678, %v2181
    %v2183 = vpop.f32.mrb[0].mxu0
    %v2184 = vpop.f32.mrb[0].mxu0
    %2185 = vdwg.mxu0
    %v2186 = vmax.f32 %v1893, 0.0
    %v2187 = vmax.f32 %v1895, 0.0
    %v2188 = vmax.f32 %v1934, 0.0
    %v2189 = vmax.f32 %v1936, 0.0
    %v2190 = vmax.f32 %v1975, 0.0
    %v2191 = vmax.f32 %v1977, 0.0
    %v2192 = vmax.f32 %v2016, 0.0
    %v2193 = vmax.f32 %v2018, 0.0
    %v2194 = vmax.f32 %v2057, 0.0
    %v2195 = vmax.f32 %v2059, 0.0
    %v2196 = vmax.f32 %v2098, 0.0
    %v2197 = vmax.f32 %v2100, 0.0
    %v2198 = vmax.f32 %v2139, 0.0
    %v2199 = vmax.f32 %v2141, 0.0
    %v2200 = vmax.f32 %v2180, 0.0
    %v2201 = vmax.f32 %v2182, 0.0
    %v2202 = vpack.c.bf16 %v2186, %v2186
    %v2203 = vpack.c.bf16 %v2187, %v2187
    %v2204 = vpack.c.bf16 %v2188, %v2188
    %v2205 = vpack.c.bf16 %v2189, %v2189
    %v2206 = vpack.c.bf16 %v2190, %v2190
    %v2207 = vpack.c.bf16 %v2191, %v2191
    %v2208 = vpack.c.bf16 %v2192, %v2192
    %v2209 = vpack.c.bf16 %v2193, %v2193
    %v2210 = vpack.c.bf16 %v2194, %v2194
    %v2211 = vpack.c.bf16 %v2195, %v2195
    %v2212 = vpack.c.bf16 %v2196, %v2196
    %v2213 = vpack.c.bf16 %v2197, %v2197
    %v2214 = vpack.c.bf16 %v2198, %v2198
    %v2215 = vpack.c.bf16 %v2199, %v2199
    %v2216 = vpack.c.bf16 %v2200, %v2200
    %v2217 = vpack.c.bf16 %v2201, %v2201
    %s2218 = scalar_lea.vmem [#allocation10], 256
    %v2219 = vld [vmem:[%s2218] sm:$0xff]
    %v2220 = vld [vmem:[%s2218 + $0x8] sm:$0xff]
    %v2221 = vld [vmem:[%s2218 + $0x10] sm:$0xff]
    %v2222 = vld [vmem:[%s2218 + $0x18] sm:$0xff]
    %v2223 = vld [vmem:[%s2218 + $0x20] sm:$0xff]
    %v2224 = vld [vmem:[%s2218 + $0x28] sm:$0xff]
    %v2225 = vld [vmem:[%s2218 + $0x30] sm:$0xff]
    %v2226 = vld [vmem:[%s2218 + $0x38] sm:$0xff]
    %v2227 = vld [vmem:[%s2218 + $0x40] sm:$0xff]
    %v2228 = vld [vmem:[%s2218 + $0x48] sm:$0xff]
    %v2229 = vld [vmem:[%s2218 + $0x50] sm:$0xff]
    %v2230 = vld [vmem:[%s2218 + $0x58] sm:$0xff]
    %v2231 = vld [vmem:[%s2218 + $0x60] sm:$0xff]
    %v2232 = vld [vmem:[%s2218 + $0x68] sm:$0xff]
    %v2233 = vld [vmem:[%s2218 + $0x70] sm:$0xff]
    %v2234 = vld [vmem:[%s2218 + $0x78] sm:$0xff]
    %v2235 = vld [vmem:[%s2218 + $0x80] sm:$0xff]
    %v2236 = vld [vmem:[%s2218 + $0x88] sm:$0xff]
    %v2237 = vld [vmem:[%s2218 + $0x90] sm:$0xff]
    %v2238 = vld [vmem:[%s2218 + $0x98] sm:$0xff]
    %v2239 = vld [vmem:[%s2218 + $0xa0] sm:$0xff]
    %v2240 = vld [vmem:[%s2218 + $0xa8] sm:$0xff]
    %v2241 = vld [vmem:[%s2218 + $0xb0] sm:$0xff]
    %v2242 = vld [vmem:[%s2218 + $0xb8] sm:$0xff]
    %v2243 = vld [vmem:[%s2218 + $0xc0] sm:$0xff]
    %v2244 = vld [vmem:[%s2218 + $0xc8] sm:$0xff]
    %v2245 = vld [vmem:[%s2218 + $0xd0] sm:$0xff]
    %v2246 = vld [vmem:[%s2218 + $0xd8] sm:$0xff]
    %v2247 = vld [vmem:[%s2218 + $0xe0] sm:$0xff]
    %v2248 = vld [vmem:[%s2218 + $0xe8] sm:$0xff]
    %v2249 = vld [vmem:[%s2218 + $0xf0] sm:$0xff]
    %v2250 = vld [vmem:[%s2218 + $0xf8] sm:$0xff]
    %v2251 = vlaneseq
    %v2252 = vshrl.u32 %v2251, 7
    %v2253 = vsub.s32 1, %v2252
    %v2254 = vrot.slane %v99, %v2253
    %v2287 = vunpack.c.l.b16 %v2219
    %v2288 = vunpack.c.h.b16 %v2219
    %v2289 = vunpack.c.l.b16 %v2220
    %v2290 = vunpack.c.h.b16 %v2220
    %v2291 = vunpack.c.l.b16 %v2221
    %v2292 = vunpack.c.h.b16 %v2221
    %v2293 = vunpack.c.l.b16 %v2222
    %v2294 = vunpack.c.h.b16 %v2222
    %v2295 = vunpack.c.l.b16 %v2223
    %v2296 = vunpack.c.h.b16 %v2223
    %v2297 = vunpack.c.l.b16 %v2224
    %v2298 = vunpack.c.h.b16 %v2224
    %v2299 = vunpack.c.l.b16 %v2225
    %v2300 = vunpack.c.h.b16 %v2225
    %v2301 = vunpack.c.l.b16 %v2226
    %v2302 = vunpack.c.h.b16 %v2226
    %v2303 = vunpack.c.l.b16 %v2227
    %v2304 = vunpack.c.h.b16 %v2227
    %v2305 = vunpack.c.l.b16 %v2228
    %v2306 = vunpack.c.h.b16 %v2228
    %v2307 = vunpack.c.l.b16 %v2229
    %v2308 = vunpack.c.h.b16 %v2229
    %v2309 = vunpack.c.l.b16 %v2230
    %v2310 = vunpack.c.h.b16 %v2230
    %v2311 = vunpack.c.l.b16 %v2231
    %v2312 = vunpack.c.h.b16 %v2231
    %v2313 = vunpack.c.l.b16 %v2232
    %v2314 = vunpack.c.h.b16 %v2232
    %v2315 = vunpack.c.l.b16 %v2233
    %v2316 = vunpack.c.h.b16 %v2233
    %v2317 = vunpack.c.l.b16 %v2234
    %v2318 = vunpack.c.h.b16 %v2234
    %v2319 = vunpack.c.l.b16 %v2235
    %v2320 = vunpack.c.h.b16 %v2235
    %v2321 = vunpack.c.l.b16 %v2236
    %v2322 = vunpack.c.h.b16 %v2236
    %v2323 = vunpack.c.l.b16 %v2237
    %v2324 = vunpack.c.h.b16 %v2237
    %v2325 = vunpack.c.l.b16 %v2238
    %v2326 = vunpack.c.h.b16 %v2238
    %v2327 = vunpack.c.l.b16 %v2239
    %v2328 = vunpack.c.h.b16 %v2239
    %v2329 = vunpack.c.l.b16 %v2240
    %v2330 = vunpack.c.h.b16 %v2240
    %v2331 = vunpack.c.l.b16 %v2241
    %v2332 = vunpack.c.h.b16 %v2241
    %v2333 = vunpack.c.l.b16 %v2242
    %v2334 = vunpack.c.h.b16 %v2242
    %v2335 = vunpack.c.l.b16 %v2243
    %v2336 = vunpack.c.h.b16 %v2243
    %v2337 = vunpack.c.l.b16 %v2244
    %v2338 = vunpack.c.h.b16 %v2244
    %v2339 = vunpack.c.l.b16 %v2245
    %v2340 = vunpack.c.h.b16 %v2245
    %v2341 = vunpack.c.l.b16 %v2246
    %v2342 = vunpack.c.h.b16 %v2246
    %v2343 = vunpack.c.l.b16 %v2247
    %v2344 = vunpack.c.h.b16 %v2247
    %v2345 = vunpack.c.l.b16 %v2248
    %v2346 = vunpack.c.h.b16 %v2248
    %v2347 = vunpack.c.l.b16 %v2249
    %v2348 = vunpack.c.h.b16 %v2249
    %v2349 = vunpack.c.l.b16 %v2250
    %v2350 = vunpack.c.h.b16 %v2250
    %v2351 = vpack.c.b16 %v2303, %v2287
    %v2352 = vpack.c.b16 %v2304, %v2288
    %v2353 = vpack.c.b16 %v2305, %v2289
    %v2354 = vpack.c.b16 %v2306, %v2290
    %v2355 = vpack.c.b16 %v2307, %v2291
    %v2356 = vpack.c.b16 %v2308, %v2292
    %v2357 = vpack.c.b16 %v2309, %v2293
    %v2358 = vpack.c.b16 %v2310, %v2294
    %v2359 = vpack.c.b16 %v2311, %v2295
    %v2360 = vpack.c.b16 %v2312, %v2296
    %v2361 = vpack.c.b16 %v2313, %v2297
    %v2362 = vpack.c.b16 %v2314, %v2298
    %v2363 = vpack.c.b16 %v2315, %v2299
    %v2364 = vpack.c.b16 %v2316, %v2300
    %v2365 = vpack.c.b16 %v2317, %v2301
    %v2366 = vpack.c.b16 %v2318, %v2302
    %v2367 = vpack.c.b16 %v2335, %v2319
    %v2368 = vpack.c.b16 %v2336, %v2320
    %v2369 = vpack.c.b16 %v2337, %v2321
    %v2370 = vpack.c.b16 %v2338, %v2322
    %v2371 = vpack.c.b16 %v2339, %v2323
    %v2372 = vpack.c.b16 %v2340, %v2324
    %v2373 = vpack.c.b16 %v2341, %v2325
    %v2374 = vpack.c.b16 %v2342, %v2326
    %v2375 = vpack.c.b16 %v2343, %v2327
    %v2376 = vpack.c.b16 %v2344, %v2328
    %v2377 = vpack.c.b16 %v2345, %v2329
    %v2378 = vpack.c.b16 %v2346, %v2330
    %v2379 = vpack.c.b16 %v2347, %v2331
    %v2380 = vpack.c.b16 %v2348, %v2332
    %v2381 = vpack.c.b16 %v2349, %v2333
    %v2382 = vpack.c.b16 %v2350, %v2334
    %2415 = vmatprep.subr.bf16.mxu0 %v2352
    %2416 = vmatpush1.bf16.xpose.msra.mxu0 %v2351
    %2417 = vmatprep.subr.bf16.mxu0 %v2368
    %2418 = vmatpush1.bf16.xpose.msra.mxu0 %v2367
    %2419 = vmatprep.subr.bf16.mxu0 0
    %2420 = vmatpush1.bf16.xpose.msra.mxu0 0
    %2421 = vmatprep.subr.bf16.mxu0 0
    %2422 = vmatpush1.bf16.xpose.msra.mxu0 0
    %2423 = vmatprep.subr.bf16.mxu0 0
    %2424 = vmatpush1.bf16.xpose.msra.mxu0 0
    %2425 = vmatprep.subr.bf16.mxu0 0
    %2426 = vmatpush1.bf16.xpose.msra.mxu0 0
    %2427 = vmatprep.subr.bf16.mxu0 0
    %2428 = vmatpush1.bf16.xpose.msra.mxu0 0
    %2429 = vmatprep.subr.bf16.mxu0 0
    %2430 = vmatpush1.bf16.xpose.msra.mxu0 0
    %2431 = vmatprep.subr.bf16.mxu0 0
    %2432 = vmatpush1.bf16.xpose.msra.mxu0 0
    %2433 = vmatprep.subr.bf16.mxu0 0
    %2434 = vmatpush1.bf16.xpose.msra.mxu0 0
    %2435 = vmatprep.subr.bf16.mxu0 0
    %2436 = vmatpush1.bf16.xpose.msra.mxu0 0
    %2437 = vmatprep.subr.bf16.mxu0 0
    %2438 = vmatpush1.bf16.xpose.msra.mxu0 0
    %2439 = vmatprep.subr.bf16.mxu0 0
    %2440 = vmatpush1.bf16.xpose.msra.mxu0 0
    %2441 = vmatprep.subr.bf16.mxu0 0
    %2442 = vmatpush1.bf16.xpose.msra.mxu0 0
    %2443 = vmatprep.subr.bf16.mxu0 0
    %2444 = vmatpush1.bf16.xpose.msra.mxu0 0
    %2445 = vmatprep.subr.bf16.mxu0 0
    %2446 = vmatpush1.bf16.xpose.msra.mxu0 0
    %2447 = vmatprep.mubr.bf16.mxu0 %v2203
    %2448 = vmatmul.mubr.bf16.gmra.mrb[0].mxu0 %v2202
    %v2449 = vpop.f32.mrb[0].mxu0
    %v2450 = vadd.f32 %v2254, %v2449
    %v2451 = vpop.f32.mrb[0].mxu0
    %v2452 = vpop.f32.mrb[0].mxu0
    %v2453 = vpop.f32.mrb[0].mxu0
    %2454 = vdwg.mxu0
    %2455 = vmatprep.subr.bf16.mxu0 %v2354
    %2456 = vmatpush1.bf16.xpose.msra.mxu0 %v2353
    %2457 = vmatprep.subr.bf16.mxu0 %v2370
    %2458 = vmatpush1.bf16.xpose.msra.mxu0 %v2369
    %2459 = vmatprep.subr.bf16.mxu0 0
    %2460 = vmatpush1.bf16.xpose.msra.mxu0 0
    %2461 = vmatprep.subr.bf16.mxu0 0
    %2462 = vmatpush1.bf16.xpose.msra.mxu0 0
    %2463 = vmatprep.subr.bf16.mxu0 0
    %2464 = vmatpush1.bf16.xpose.msra.mxu0 0
    %2465 = vmatprep.subr.bf16.mxu0 0
    %2466 = vmatpush1.bf16.xpose.msra.mxu0 0
    %2467 = vmatprep.subr.bf16.mxu0 0
    %2468 = vmatpush1.bf16.xpose.msra.mxu0 0
    %2469 = vmatprep.subr.bf16.mxu0 0
    %2470 = vmatpush1.bf16.xpose.msra.mxu0 0
    %2471 = vmatprep.subr.bf16.mxu0 0
    %2472 = vmatpush1.bf16.xpose.msra.mxu0 0
    %2473 = vmatprep.subr.bf16.mxu0 0
    %2474 = vmatpush1.bf16.xpose.msra.mxu0 0
    %2475 = vmatprep.subr.bf16.mxu0 0
    %2476 = vmatpush1.bf16.xpose.msra.mxu0 0
    %2477 = vmatprep.subr.bf16.mxu0 0
    %2478 = vmatpush1.bf16.xpose.msra.mxu0 0
    %2479 = vmatprep.subr.bf16.mxu0 0
    %2480 = vmatpush1.bf16.xpose.msra.mxu0 0
    %2481 = vmatprep.subr.bf16.mxu0 0
    %2482 = vmatpush1.bf16.xpose.msra.mxu0 0
    %2483 = vmatprep.subr.bf16.mxu0 0
    %2484 = vmatpush1.bf16.xpose.msra.mxu0 0
    %2485 = vmatprep.subr.bf16.mxu0 0
    %2486 = vmatpush1.bf16.xpose.msra.mxu0 0
    %2487 = vmatprep.mubr.bf16.mxu0 %v2205
    %2488 = vmatmul.mubr.bf16.gmra.mrb[0].mxu0 %v2204
    %v2489 = vpop.f32.mrb[0].mxu0
    %v2490 = vadd.f32 %v2450, %v2489
    %v2491 = vpop.f32.mrb[0].mxu0
    %v2492 = vpop.f32.mrb[0].mxu0
    %v2493 = vpop.f32.mrb[0].mxu0
    %2494 = vdwg.mxu0
    %2495 = vmatprep.subr.bf16.mxu0 %v2356
    %2496 = vmatpush1.bf16.xpose.msra.mxu0 %v2355
    %2497 = vmatprep.subr.bf16.mxu0 %v2372
    %2498 = vmatpush1.bf16.xpose.msra.mxu0 %v2371
    %2499 = vmatprep.subr.bf16.mxu0 0
    %2500 = vmatpush1.bf16.xpose.msra.mxu0 0
    %2501 = vmatprep.subr.bf16.mxu0 0
    %2502 = vmatpush1.bf16.xpose.msra.mxu0 0
    %2503 = vmatprep.subr.bf16.mxu0 0
    %2504 = vmatpush1.bf16.xpose.msra.mxu0 0
    %2505 = vmatprep.subr.bf16.mxu0 0
    %2506 = vmatpush1.bf16.xpose.msra.mxu0 0
    %2507 = vmatprep.subr.bf16.mxu0 0
    %2508 = vmatpush1.bf16.xpose.msra.mxu0 0
    %2509 = vmatprep.subr.bf16.mxu0 0
    %2510 = vmatpush1.bf16.xpose.msra.mxu0 0
    %2511 = vmatprep.subr.bf16.mxu0 0
    %2512 = vmatpush1.bf16.xpose.msra.mxu0 0
    %2513 = vmatprep.subr.bf16.mxu0 0
    %2514 = vmatpush1.bf16.xpose.msra.mxu0 0
    %2515 = vmatprep.subr.bf16.mxu0 0
    %2516 = vmatpush1.bf16.xpose.msra.mxu0 0
    %2517 = vmatprep.subr.bf16.mxu0 0
    %2518 = vmatpush1.bf16.xpose.msra.mxu0 0
    %2519 = vmatprep.subr.bf16.mxu0 0
    %2520 = vmatpush1.bf16.xpose.msra.mxu0 0
    %2521 = vmatprep.subr.bf16.mxu0 0
    %2522 = vmatpush1.bf16.xpose.msra.mxu0 0
    %2523 = vmatprep.subr.bf16.mxu0 0
    %2524 = vmatpush1.bf16.xpose.msra.mxu0 0
    %2525 = vmatprep.subr.bf16.mxu0 0
    %2526 = vmatpush1.bf16.xpose.msra.mxu0 0
    %2527 = vmatprep.mubr.bf16.mxu0 %v2207
    %2528 = vmatmul.mubr.bf16.gmra.mrb[0].mxu0 %v2206
    %v2529 = vpop.f32.mrb[0].mxu0
    %v2530 = vadd.f32 %v2490, %v2529
    %v2531 = vpop.f32.mrb[0].mxu0
    %v2532 = vpop.f32.mrb[0].mxu0
    %v2533 = vpop.f32.mrb[0].mxu0
    %2534 = vdwg.mxu0
    %2535 = vmatprep.subr.bf16.mxu0 %v2358
    %2536 = vmatpush1.bf16.xpose.msra.mxu0 %v2357
    %2537 = vmatprep.subr.bf16.mxu0 %v2374
    %2538 = vmatpush1.bf16.xpose.msra.mxu0 %v2373
    %2539 = vmatprep.subr.bf16.mxu0 0
    %2540 = vmatpush1.bf16.xpose.msra.mxu0 0
    %2541 = vmatprep.subr.bf16.mxu0 0
    %2542 = vmatpush1.bf16.xpose.msra.mxu0 0
    %2543 = vmatprep.subr.bf16.mxu0 0
    %2544 = vmatpush1.bf16.xpose.msra.mxu0 0
    %2545 = vmatprep.subr.bf16.mxu0 0
    %2546 = vmatpush1.bf16.xpose.msra.mxu0 0
    %2547 = vmatprep.subr.bf16.mxu0 0
    %2548 = vmatpush1.bf16.xpose.msra.mxu0 0
    %2549 = vmatprep.subr.bf16.mxu0 0
    %2550 = vmatpush1.bf16.xpose.msra.mxu0 0
    %2551 = vmatprep.subr.bf16.mxu0 0
    %2552 = vmatpush1.bf16.xpose.msra.mxu0 0
    %2553 = vmatprep.subr.bf16.mxu0 0
    %2554 = vmatpush1.bf16.xpose.msra.mxu0 0
    %2555 = vmatprep.subr.bf16.mxu0 0
    %2556 = vmatpush1.bf16.xpose.msra.mxu0 0
    %2557 = vmatprep.subr.bf16.mxu0 0
    %2558 = vmatpush1.bf16.xpose.msra.mxu0 0
    %2559 = vmatprep.subr.bf16.mxu0 0
    %2560 = vmatpush1.bf16.xpose.msra.mxu0 0
    %2561 = vmatprep.subr.bf16.mxu0 0
    %2562 = vmatpush1.bf16.xpose.msra.mxu0 0
    %2563 = vmatprep.subr.bf16.mxu0 0
    %2564 = vmatpush1.bf16.xpose.msra.mxu0 0
    %2565 = vmatprep.subr.bf16.mxu0 0
    %2566 = vmatpush1.bf16.xpose.msra.mxu0 0
    %2567 = vmatprep.mubr.bf16.mxu0 %v2209
    %2568 = vmatmul.mubr.bf16.gmra.mrb[0].mxu0 %v2208
    %v2569 = vpop.f32.mrb[0].mxu0
    %v2570 = vadd.f32 %v2530, %v2569
    %v2571 = vpop.f32.mrb[0].mxu0
    %v2572 = vpop.f32.mrb[0].mxu0
    %v2573 = vpop.f32.mrb[0].mxu0
    %2574 = vdwg.mxu0
    %2575 = vmatprep.subr.bf16.mxu0 %v2360
    %2576 = vmatpush1.bf16.xpose.msra.mxu0 %v2359
    %2577 = vmatprep.subr.bf16.mxu0 %v2376
    %2578 = vmatpush1.bf16.xpose.msra.mxu0 %v2375
    %2579 = vmatprep.subr.bf16.mxu0 0
    %2580 = vmatpush1.bf16.xpose.msra.mxu0 0
    %2581 = vmatprep.subr.bf16.mxu0 0
    %2582 = vmatpush1.bf16.xpose.msra.mxu0 0
    %2583 = vmatprep.subr.bf16.mxu0 0
    %2584 = vmatpush1.bf16.xpose.msra.mxu0 0
    %2585 = vmatprep.subr.bf16.mxu0 0
    %2586 = vmatpush1.bf16.xpose.msra.mxu0 0
    %2587 = vmatprep.subr.bf16.mxu0 0
    %2588 = vmatpush1.bf16.xpose.msra.mxu0 0
    %2589 = vmatprep.subr.bf16.mxu0 0
    %2590 = vmatpush1.bf16.xpose.msra.mxu0 0
    %2591 = vmatprep.subr.bf16.mxu0 0
    %2592 = vmatpush1.bf16.xpose.msra.mxu0 0
    %2593 = vmatprep.subr.bf16.mxu0 0
    %2594 = vmatpush1.bf16.xpose.msra.mxu0 0
    %2595 = vmatprep.subr.bf16.mxu0 0
    %2596 = vmatpush1.bf16.xpose.msra.mxu0 0
    %2597 = vmatprep.subr.bf16.mxu0 0
    %2598 = vmatpush1.bf16.xpose.msra.mxu0 0
    %2599 = vmatprep.subr.bf16.mxu0 0
    %2600 = vmatpush1.bf16.xpose.msra.mxu0 0
    %2601 = vmatprep.subr.bf16.mxu0 0
    %2602 = vmatpush1.bf16.xpose.msra.mxu0 0
    %2603 = vmatprep.subr.bf16.mxu0 0
    %2604 = vmatpush1.bf16.xpose.msra.mxu0 0
    %2605 = vmatprep.subr.bf16.mxu0 0
    %2606 = vmatpush1.bf16.xpose.msra.mxu0 0
    %2607 = vmatprep.mubr.bf16.mxu0 %v2211
    %2608 = vmatmul.mubr.bf16.gmra.mrb[0].mxu0 %v2210
    %v2609 = vpop.f32.mrb[0].mxu0
    %v2610 = vadd.f32 %v2570, %v2609
    %v2611 = vpop.f32.mrb[0].mxu0
    %v2612 = vpop.f32.mrb[0].mxu0
    %v2613 = vpop.f32.mrb[0].mxu0
    %2614 = vdwg.mxu0
    %2615 = vmatprep.subr.bf16.mxu0 %v2362
    %2616 = vmatpush1.bf16.xpose.msra.mxu0 %v2361
    %2617 = vmatprep.subr.bf16.mxu0 %v2378
    %2618 = vmatpush1.bf16.xpose.msra.mxu0 %v2377
    %2619 = vmatprep.subr.bf16.mxu0 0
    %2620 = vmatpush1.bf16.xpose.msra.mxu0 0
    %2621 = vmatprep.subr.bf16.mxu0 0
    %2622 = vmatpush1.bf16.xpose.msra.mxu0 0
    %2623 = vmatprep.subr.bf16.mxu0 0
    %2624 = vmatpush1.bf16.xpose.msra.mxu0 0
    %2625 = vmatprep.subr.bf16.mxu0 0
    %2626 = vmatpush1.bf16.xpose.msra.mxu0 0
    %2627 = vmatprep.subr.bf16.mxu0 0
    %2628 = vmatpush1.bf16.xpose.msra.mxu0 0
    %2629 = vmatprep.subr.bf16.mxu0 0
    %2630 = vmatpush1.bf16.xpose.msra.mxu0 0
    %2631 = vmatprep.subr.bf16.mxu0 0
    %2632 = vmatpush1.bf16.xpose.msra.mxu0 0
    %2633 = vmatprep.subr.bf16.mxu0 0
    %2634 = vmatpush1.bf16.xpose.msra.mxu0 0
    %2635 = vmatprep.subr.bf16.mxu0 0
    %2636 = vmatpush1.bf16.xpose.msra.mxu0 0
    %2637 = vmatprep.subr.bf16.mxu0 0
    %2638 = vmatpush1.bf16.xpose.msra.mxu0 0
    %2639 = vmatprep.subr.bf16.mxu0 0
    %2640 = vmatpush1.bf16.xpose.msra.mxu0 0
    %2641 = vmatprep.subr.bf16.mxu0 0
    %2642 = vmatpush1.bf16.xpose.msra.mxu0 0
    %2643 = vmatprep.subr.bf16.mxu0 0
    %2644 = vmatpush1.bf16.xpose.msra.mxu0 0
    %2645 = vmatprep.subr.bf16.mxu0 0
    %2646 = vmatpush1.bf16.xpose.msra.mxu0 0
    %2647 = vmatprep.mubr.bf16.mxu0 %v2213
    %2648 = vmatmul.mubr.bf16.gmra.mrb[0].mxu0 %v2212
    %v2649 = vpop.f32.mrb[0].mxu0
    %v2650 = vadd.f32 %v2610, %v2649
    %v2651 = vpop.f32.mrb[0].mxu0
    %v2652 = vpop.f32.mrb[0].mxu0
    %v2653 = vpop.f32.mrb[0].mxu0
    %2654 = vdwg.mxu0
    %2655 = vmatprep.subr.bf16.mxu0 %v2364
    %2656 = vmatpush1.bf16.xpose.msra.mxu0 %v2363
    %2657 = vmatprep.subr.bf16.mxu0 %v2380
    %2658 = vmatpush1.bf16.xpose.msra.mxu0 %v2379
    %2659 = vmatprep.subr.bf16.mxu0 0
    %2660 = vmatpush1.bf16.xpose.msra.mxu0 0
    %2661 = vmatprep.subr.bf16.mxu0 0
    %2662 = vmatpush1.bf16.xpose.msra.mxu0 0
    %2663 = vmatprep.subr.bf16.mxu0 0
    %2664 = vmatpush1.bf16.xpose.msra.mxu0 0
    %2665 = vmatprep.subr.bf16.mxu0 0
    %2666 = vmatpush1.bf16.xpose.msra.mxu0 0
    %2667 = vmatprep.subr.bf16.mxu0 0
    %2668 = vmatpush1.bf16.xpose.msra.mxu0 0
    %2669 = vmatprep.subr.bf16.mxu0 0
    %2670 = vmatpush1.bf16.xpose.msra.mxu0 0
    %2671 = vmatprep.subr.bf16.mxu0 0
    %2672 = vmatpush1.bf16.xpose.msra.mxu0 0
    %2673 = vmatprep.subr.bf16.mxu0 0
    %2674 = vmatpush1.bf16.xpose.msra.mxu0 0
    %2675 = vmatprep.subr.bf16.mxu0 0
    %2676 = vmatpush1.bf16.xpose.msra.mxu0 0
    %2677 = vmatprep.subr.bf16.mxu0 0
    %2678 = vmatpush1.bf16.xpose.msra.mxu0 0
    %2679 = vmatprep.subr.bf16.mxu0 0
    %2680 = vmatpush1.bf16.xpose.msra.mxu0 0
    %2681 = vmatprep.subr.bf16.mxu0 0
    %2682 = vmatpush1.bf16.xpose.msra.mxu0 0
    %2683 = vmatprep.subr.bf16.mxu0 0
    %2684 = vmatpush1.bf16.xpose.msra.mxu0 0
    %2685 = vmatprep.subr.bf16.mxu0 0
    %2686 = vmatpush1.bf16.xpose.msra.mxu0 0
    %2687 = vmatprep.mubr.bf16.mxu0 %v2215
    %2688 = vmatmul.mubr.bf16.gmra.mrb[0].mxu0 %v2214
    %v2689 = vpop.f32.mrb[0].mxu0
    %v2690 = vadd.f32 %v2650, %v2689
    %v2691 = vpop.f32.mrb[0].mxu0
    %v2692 = vpop.f32.mrb[0].mxu0
    %v2693 = vpop.f32.mrb[0].mxu0
    %2694 = vdwg.mxu0
    %2695 = vmatprep.subr.bf16.mxu0 %v2366
    %2696 = vmatpush1.bf16.xpose.msra.mxu0 %v2365
    %2697 = vmatprep.subr.bf16.mxu0 %v2382
    %2698 = vmatpush1.bf16.xpose.msra.mxu0 %v2381
    %2699 = vmatprep.subr.bf16.mxu0 0
    %2700 = vmatpush1.bf16.xpose.msra.mxu0 0
    %2701 = vmatprep.subr.bf16.mxu0 0
    %2702 = vmatpush1.bf16.xpose.msra.mxu0 0
    %2703 = vmatprep.subr.bf16.mxu0 0
    %2704 = vmatpush1.bf16.xpose.msra.mxu0 0
    %2705 = vmatprep.subr.bf16.mxu0 0
    %2706 = vmatpush1.bf16.xpose.msra.mxu0 0
    %2707 = vmatprep.subr.bf16.mxu0 0
    %2708 = vmatpush1.bf16.xpose.msra.mxu0 0
    %2709 = vmatprep.subr.bf16.mxu0 0
    %2710 = vmatpush1.bf16.xpose.msra.mxu0 0
    %2711 = vmatprep.subr.bf16.mxu0 0
    %2712 = vmatpush1.bf16.xpose.msra.mxu0 0
    %2713 = vmatprep.subr.bf16.mxu0 0
    %2714 = vmatpush1.bf16.xpose.msra.mxu0 0
    %2715 = vmatprep.subr.bf16.mxu0 0
    %2716 = vmatpush1.bf16.xpose.msra.mxu0 0
    %2717 = vmatprep.subr.bf16.mxu0 0
    %2718 = vmatpush1.bf16.xpose.msra.mxu0 0
    %2719 = vmatprep.subr.bf16.mxu0 0
    %2720 = vmatpush1.bf16.xpose.msra.mxu0 0
    %2721 = vmatprep.subr.bf16.mxu0 0
    %2722 = vmatpush1.bf16.xpose.msra.mxu0 0
    %2723 = vmatprep.subr.bf16.mxu0 0
    %2724 = vmatpush1.bf16.xpose.msra.mxu0 0
    %2725 = vmatprep.subr.bf16.mxu0 0
    %2726 = vmatpush1.bf16.xpose.msra.mxu0 0
    %2727 = vmatprep.mubr.bf16.mxu0 %v2217
    %2728 = vmatmul.mubr.bf16.gmra.mrb[0].mxu0 %v2216
    %v2729 = vpop.f32.mrb[0].mxu0
    %v2730 = vadd.f32 %v2690, %v2729
    %v2731 = vpop.f32.mrb[0].mxu0
    %v2732 = vpop.f32.mrb[0].mxu0
    %v2733 = vpop.f32.mrb[0].mxu0
    %2734 = vdwg.mxu0
    %v2735 = vadd.f32 %v1574, %v2730
    %v2736 = vsel %vm189, %v2735, 0.0
    %2737 = vadd.xlane.f32.xlu0 %v2736
    %v2738 = vpop.xlane.xlu0 %2737
    %v2739 = vmul.f32 %v2738, %v267
    %v2740 = vsub.f32 %v2735, %v2739
    %v2741 = vmul.f32 %v2740, %v2740
    %v2742 = vsel %vm189, %v2741, 0.0
    %2743 = vadd.xlane.f32.xlu0 %v2742
    %v2744 = vpop.xlane.xlu0 %2743
    %v2745 = vmul.f32 %v2744, %v267
    %v2746 = vadd.f32 %v2745, 1e-05
    %v2747 = vrsqrt.pop %v2746
    %v2748 = vmul.f32 %v2740, %v2747
    %v2749 = vlaneseq
    %v2750 = vshrl.u32 %v2749, 7
    %v2751 = vsub.s32 4, %v2750
    %v2752 = vrot.slane %v99, %v2751
    %v2753 = vmul.f32 %v2748, %v2752
    %v2754 = vlaneseq
    %v2755 = vshrl.u32 %v2754, 7
    %v2756 = vsub.s32 5, %v2755
    %v2757 = vrot.slane %v99, %v2756
    %v2758 = vadd.f32 %v2753, %v2757
    %v2759 = vlaneseq
    %v2760 = vshrl.u32 %v2759, 7
    %v2761 = vsub.s32 1, %v2760
    %v2762 = vrot.slane %v97, %v2761
    %v2763 = vmul.f32 %v2758, %v2762
    %v2764 = vsel %vm189, %v2763, 0.0
    %2765 = vadd.xlane.f32.xlu0 %v2764
    %v2766 = vpop.xlane.xlu0 %2765
    %v2767 = vrot.slane %v97, 2
    %s2768 = vtos %v2767
    %v2769 = vstv %s2768
    %v2770 = vadd.f32 %v2766, %v2769
    %2771 = vst [vmem:[#allocation11] sm:$0xff] %v2770
    // Predicated region
    $region54: #{tpu_custom_call.1} parent=1 // pred_check
      _
    $region55: #{tpu_custom_call.1} parent=1 // pred_check_branch
      %2773 = sbr.rel (0) target = $region57
    $region56: #{tpu_custom_call.1} parent=1 // pred_region
      %s2775 = ssub.s32 128, 128
      %2776 = vsyncadd [#allocation4], %s2775
      %s2778 = sshll.u32 [#allocation11], 4
      %s2779 = int_to_ptr.vmem [resolvable:$true] %s2778
      %2781 = dma.vmem_to_hbm [thread:$0]  %s2779, 128, %s8, [#allocation4]
    $region57: #{tpu_custom_call.1} parent=1 // pred_fallthru
      _
    // Predicated region
    $region58: #{tpu_custom_call.1} parent=1 // pred_check
      _
    $region59: #{tpu_custom_call.1} parent=1 // pred_check_branch
      %2783 = sbr.rel (0) target = $region61
    $region60: #{tpu_custom_call.1} parent=1 // pred_region
      %2784 = dma.done [#allocation4], 128
    $region61: #{tpu_custom_call.1} parent=1 // pred_fallthru
      _
    %2785 = vsyncpa [#allocation3], 1
    %2786 = vsyncpa [#allocation6], 1
    %2787 = vsyncpa [#allocation9], 1
    %2788 = vsyncpa [#allocation4], 1

</llo_original>
